<compile_context>
chip_gen: v6e
topology: v6e:2x2x1
jax: 0.10.0
libtpu: 0.0.40
codegen_flags: <defaults>
</compile_context>

<pallas_src>
import functools

import jax
import jax.numpy as jnp
from jax.experimental import pallas as pl
from jax.experimental.pallas import tpu as pltpu


def _round_up(n, m):
    return ((n + m - 1) // m) * m


def escm2_kernel(uidx_ref, iidx_ref, utab_ref, itab_ref, *refs,
                 num_users, num_items):
    cvr_p = refs[:11]
    ctr_p = refs[11:22]
    out_ref = refs[22]

    uidx = uidx_ref[...]            # (BM, 1) int32
    iidx = iidx_ref[...]            # (BM, 1) int32
    bm = uidx.shape[0]

    # In-kernel gather via one-hot matmul; tables are VMEM-resident full blocks.
    u_iota = jax.lax.broadcasted_iota(jnp.int32, (bm, num_users), 1)
    i_iota = jax.lax.broadcasted_iota(jnp.int32, (bm, num_items), 1)
    onehot_u = (uidx == u_iota).astype(jnp.float32)     # (BM, U)
    onehot_i = (iidx == i_iota).astype(jnp.float32)     # (BM, I)
    ue = jnp.dot(onehot_u, utab_ref[...], preferred_element_type=jnp.float32)   # (BM, K)
    ie = jnp.dot(onehot_i, itab_ref[...], preferred_element_type=jnp.float32)   # (BM, K)

    def head(p):
        w1u, w1i, b1, w2, b2, w3, b3, w4, b4, w5, b5 = p
        # Layer 1 on the split concat: z @ W1.T == ue @ W1u + ie @ W1i
        h = jnp.dot(ue, w1u[...], preferred_element_type=jnp.float32)
        h = h + jnp.dot(ie, w1i[...], preferred_element_type=jnp.float32)
        h = jnp.maximum(h + b1[...], 0.0)                                         # (BM, 360)
        h = jnp.maximum(jnp.dot(h, w2[...],
                                preferred_element_type=jnp.float32) + b2[...], 0.0)  # (BM, 200)
        h = jnp.maximum(jnp.dot(h, w3[...],
                                preferred_element_type=jnp.float32) + b3[...], 0.0)  # (BM, 80)
        h = jnp.maximum(jnp.dot(h, w4[...],
                                preferred_element_type=jnp.float32) + b4[...], 0.0)  # (BM, 2)
        return jnp.dot(h, w5[...], preferred_element_type=jnp.float32) + b5[...]     # (BM, 1)

    out_cvr = head(cvr_p)
    out_ctr = head(ctr_p)
    out_ctcvr = jax.nn.sigmoid(out_ctr) * jax.nn.sigmoid(out_cvr)

    out_ref[:, 0:1] = out_cvr
    out_ref[:, 1:2] = out_ctr
    out_ref[:, 2:3] = out_ctcvr


def _prep_head_params(params, K):
    """params: list of 5 (W [out,in], b [out]) PyTorch-layout pairs -> flat kernel args."""
    (w1, b1), (w2, b2), (w3, b3), (w4, b4), (w5, b5) = params
    w1t = w1.T                      # (2K, 360)
    return [
        w1t[:K], w1t[K:], b1.reshape(1, -1),    # user half, item half of layer-1
        w2.T, b2.reshape(1, -1),
        w3.T, b3.reshape(1, -1),
        w4.T, b4.reshape(1, -1),
        w5.T, b5.reshape(1, -1),
    ]


def escm2_forward(x, user_table, item_table, cvr_params, ctr_params, block_m=128):
    """x: int32 [B,2]; tables [U,K]/[I,K]; *_params: 5 (W,b) pairs per head (torch layout)."""
    B = x.shape[0]
    U, K = user_table.shape
    I, _ = item_table.shape

    # Pick a batch block: multiple of 8 sublanes, up to 128 rows per grid step.
    BM = min(block_m, _round_up(B, 8))
    B_pad = _round_up(B, BM)

    uidx = x[:, 0].astype(jnp.int32)
    iidx = x[:, 1].astype(jnp.int32)
    if B_pad != B:
        pad = B_pad - B
        uidx = jnp.concatenate([uidx, jnp.zeros((pad,), jnp.int32)])
        iidx = jnp.concatenate([iidx, jnp.zeros((pad,), jnp.int32)])
    uidx = uidx.reshape(B_pad, 1)
    iidx = iidx.reshape(B_pad, 1)

    cvr_flat = _prep_head_params(cvr_params, K)
    ctr_flat = _prep_head_params(ctr_params, K)

    def full_spec(a):
        shp = a.shape
        return pl.BlockSpec(shp, lambda i, _n=len(shp): (0,) * _n)

    in_specs = (
        [pl.BlockSpec((BM, 1), lambda i: (i, 0)),
         pl.BlockSpec((BM, 1), lambda i: (i, 0)),
         full_spec(user_table),
         full_spec(item_table)]
        + [full_spec(a) for a in cvr_flat]
        + [full_spec(a) for a in ctr_flat]
    )

    nb = B_pad // BM
    out = pl.pallas_call(
        functools.partial(escm2_kernel, num_users=U, num_items=I),
        out_shape=jax.ShapeDtypeStruct((B_pad, 3), jnp.float32),
        grid=(nb,),
        in_specs=in_specs,
        out_specs=pl.BlockSpec((BM, 3), lambda i: (i, 0)),
        compiler_params=pltpu.CompilerParams(
            dimension_semantics=("parallel",)),
    )(uidx, iidx, user_table, item_table, *cvr_flat, *ctr_flat)

    out = out[:B]
    return out[:, 0:1], out[:, 1:2], out[:, 2:3]


# ----------------------------- pure-JAX reference -----------------------------

def _mlp_ref(z, params):
    h = z
    for (w, b) in params[:-1]:
        h = jnp.maximum(
            jnp.dot(h, w.T, precision=jax.lax.Precision.HIGHEST) + b, 0.0)
    w, b = params[-1]
    return jnp.dot(h, w.T, precision=jax.lax.Precision.HIGHEST) + b


def escm2_reference(x, user_table, item_table, cvr_params, ctr_params):
    ue = user_table[x[:, 0]]
    ie = item_table[x[:, 1]]
    z = jnp.concatenate([ue, ie], axis=1)
    out_cvr = _mlp_ref(z, cvr_params)
    out_ctr = _mlp_ref(z, ctr_params)
    out_ctcvr = jax.nn.sigmoid(out_ctr) * jax.nn.sigmoid(out_cvr)
    return out_cvr, out_ctr, out_ctcvr


if __name__ == "__main__":
    num_users, num_items, K = 8, 10, 32
    B = 16
    mlp_dims = [2 * K, 360, 200, 80, 2, 1]

    key = jax.random.PRNGKey(0)
    k_u, k_i, k_xu, k_xi, k_cvr, k_ctr = jax.random.split(key, 6)

    user_table = jax.random.normal(k_u, (num_users, K), dtype=jnp.float32)
    item_table = jax.random.normal(k_i, (num_items, K), dtype=jnp.float32)

    def init_linear(kk, din, dout):
        kw, kb = jax.random.split(kk)
        s = 1.0 / jnp.sqrt(jnp.float32(din))
        w = jax.random.uniform(kw, (dout, din), jnp.float32, -s, s)
        b = jax.random.uniform(kb, (dout,), jnp.float32, -s, s)
        return w, b

    def init_mlp(kk, dims):
        ks = jax.random.split(kk, len(dims) - 1)
        return [init_linear(ks[j], dims[j], dims[j + 1]) for j in range(len(dims) - 1)]

    cvr_params = init_mlp(k_cvr, mlp_dims)
    ctr_params = init_mlp(k_ctr, mlp_dims)

    x = jnp.stack([
        jax.random.randint(k_xu, (B,), 0, num_users, dtype=jnp.int32),
        jax.random.randint(k_xi, (B,), 0, num_items, dtype=jnp.int32),
    ], axis=1)

    out_cvr, out_ctr, out_ctcvr = escm2_forward(
        x, user_table, item_table, cvr_params, ctr_params)
    jax.block_until_ready((out_cvr, out_ctr, out_ctcvr))

    ref_cvr, ref_ctr, ref_ctcvr = escm2_reference(
        x, user_table, item_table, cvr_params, ctr_params)

    assert out_cvr.shape == (B, 1) and out_ctr.shape == (B, 1) and out_ctcvr.shape == (B, 1)
    assert jnp.allclose(out_cvr, ref_cvr, atol=1e-3, rtol=1e-3)
    assert jnp.allclose(out_ctr, ref_ctr, atol=1e-3, rtol=1e-3)
    assert jnp.allclose(out_ctcvr, ref_ctcvr, atol=1e-3, rtol=1e-3)

    print("KERNEL_OK")
</pallas_src>

<mosaic_0001>
module attributes {stable_mosaic.version = 11 : i64} {
  func.func @escm2_kernel(%arg0: i32, %arg1: memref<16x1xi32, #tpu.memory_space<vmem>>, %arg2: memref<16x1xi32, #tpu.memory_space<vmem>>, %arg3: memref<8x32xf32, #tpu.memory_space<vmem>>, %arg4: memref<10x32xf32, #tpu.memory_space<vmem>>, %arg5: memref<32x360xf32, #tpu.memory_space<vmem>>, %arg6: memref<32x360xf32, #tpu.memory_space<vmem>>, %arg7: memref<1x360xf32, #tpu.memory_space<vmem>>, %arg8: memref<360x200xf32, #tpu.memory_space<vmem>>, %arg9: memref<1x200xf32, #tpu.memory_space<vmem>>, %arg10: memref<200x80xf32, #tpu.memory_space<vmem>>, %arg11: memref<1x80xf32, #tpu.memory_space<vmem>>, %arg12: memref<80x2xf32, #tpu.memory_space<vmem>>, %arg13: memref<1x2xf32, #tpu.memory_space<vmem>>, %arg14: memref<2x1xf32, #tpu.memory_space<vmem>>, %arg15: memref<1x1xf32, #tpu.memory_space<vmem>>, %arg16: memref<32x360xf32, #tpu.memory_space<vmem>>, %arg17: memref<32x360xf32, #tpu.memory_space<vmem>>, %arg18: memref<1x360xf32, #tpu.memory_space<vmem>>, %arg19: memref<360x200xf32, #tpu.memory_space<vmem>>, %arg20: memref<1x200xf32, #tpu.memory_space<vmem>>, %arg21: memref<200x80xf32, #tpu.memory_space<vmem>>, %arg22: memref<1x80xf32, #tpu.memory_space<vmem>>, %arg23: memref<80x2xf32, #tpu.memory_space<vmem>>, %arg24: memref<1x2xf32, #tpu.memory_space<vmem>>, %arg25: memref<2x1xf32, #tpu.memory_space<vmem>>, %arg26: memref<1x1xf32, #tpu.memory_space<vmem>>, %arg27: memref<16x3xf32, #tpu.memory_space<vmem>>) attributes {dimension_semantics = [#tpu.dimension_semantics<parallel>], iteration_bounds = array<i64: 1>, scalar_prefetch = 0 : i64, scratch_operands = 0 : i64, tpu.core_type = #tpu.core_type<tc>, window_params = [{transform_indices = @transform_0, window_bounds = array<i64: 16, 1>}, {transform_indices = @transform_1, window_bounds = array<i64: 16, 1>}, {pipeline_mode = #tpu.pipeline_mode<synchronous>, transform_indices = @transform_2, window_bounds = array<i64: 8, 32>}, {pipeline_mode = #tpu.pipeline_mode<synchronous>, transform_indices = @transform_3, window_bounds = array<i64: 10, 32>}, {pipeline_mode = #tpu.pipeline_mode<synchronous>, transform_indices = @transform_4, window_bounds = array<i64: 32, 360>}, {pipeline_mode = #tpu.pipeline_mode<synchronous>, transform_indices = @transform_5, window_bounds = array<i64: 32, 360>}, {pipeline_mode = #tpu.pipeline_mode<synchronous>, transform_indices = @transform_6, window_bounds = array<i64: 1, 360>}, {pipeline_mode = #tpu.pipeline_mode<synchronous>, transform_indices = @transform_7, window_bounds = array<i64: 360, 200>}, {pipeline_mode = #tpu.pipeline_mode<synchronous>, transform_indices = @transform_8, window_bounds = array<i64: 1, 200>}, {pipeline_mode = #tpu.pipeline_mode<synchronous>, transform_indices = @transform_9, window_bounds = array<i64: 200, 80>}, {pipeline_mode = #tpu.pipeline_mode<synchronous>, transform_indices = @transform_10, window_bounds = array<i64: 1, 80>}, {pipeline_mode = #tpu.pipeline_mode<synchronous>, transform_indices = @transform_11, window_bounds = array<i64: 80, 2>}, {pipeline_mode = #tpu.pipeline_mode<synchronous>, transform_indices = @transform_12, window_bounds = array<i64: 1, 2>}, {pipeline_mode = #tpu.pipeline_mode<synchronous>, transform_indices = @transform_13, window_bounds = array<i64: 2, 1>}, {pipeline_mode = #tpu.pipeline_mode<synchronous>, transform_indices = @transform_14, window_bounds = array<i64: 1, 1>}, {pipeline_mode = #tpu.pipeline_mode<synchronous>, transform_indices = @transform_15, window_bounds = array<i64: 32, 360>}, {pipeline_mode = #tpu.pipeline_mode<synchronous>, transform_indices = @transform_16, window_bounds = array<i64: 32, 360>}, {pipeline_mode = #tpu.pipeline_mode<synchronous>, transform_indices = @transform_17, window_bounds = array<i64: 1, 360>}, {pipeline_mode = #tpu.pipeline_mode<synchronous>, transform_indices = @transform_18, window_bounds = array<i64: 360, 200>}, {pipeline_mode = #tpu.pipeline_mode<synchronous>, transform_indices = @transform_19, window_bounds = array<i64: 1, 200>}, {pipeline_mode = #tpu.pipeline_mode<synchronous>, transform_indices = @transform_20, window_bounds = array<i64: 200, 80>}, {pipeline_mode = #tpu.pipeline_mode<synchronous>, transform_indices = @transform_21, window_bounds = array<i64: 1, 80>}, {pipeline_mode = #tpu.pipeline_mode<synchronous>, transform_indices = @transform_22, window_bounds = array<i64: 80, 2>}, {pipeline_mode = #tpu.pipeline_mode<synchronous>, transform_indices = @transform_23, window_bounds = array<i64: 1, 2>}, {pipeline_mode = #tpu.pipeline_mode<synchronous>, transform_indices = @transform_24, window_bounds = array<i64: 2, 1>}, {pipeline_mode = #tpu.pipeline_mode<synchronous>, transform_indices = @transform_25, window_bounds = array<i64: 1, 1>}, {transform_indices = @transform_26, window_bounds = array<i64: 16, 3>}]} {
    %c0 = arith.constant 0 : index
    %c0_0 = arith.constant 0 : index
    %0 = vector.load %arg1[%c0, %c0_0] : memref<16x1xi32, #tpu.memory_space<vmem>>, vector<16x1xi32>
    %c0_1 = arith.constant 0 : index
    %c0_2 = arith.constant 0 : index
    %1 = vector.load %arg2[%c0_1, %c0_2] : memref<16x1xi32, #tpu.memory_space<vmem>>, vector<16x1xi32>
    %2 = tpu.iota {dimensions = array<i32: 1>} : vector<16x8xi32>
    %3 = tpu.iota {dimensions = array<i32: 1>} : vector<16x10xi32>
    %4 = vector.broadcast %0 : vector<16x1xi32> to vector<16x8xi32>
    %5 = arith.cmpi eq, %4, %2 : vector<16x8xi32>
    %6 = arith.extui %5 : vector<16x8xi1> to vector<16x8xi32>
    %7 = arith.sitofp %6 : vector<16x8xi32> to vector<16x8xf32>
    %8 = vector.broadcast %1 : vector<16x1xi32> to vector<16x10xi32>
    %9 = arith.cmpi eq, %8, %3 : vector<16x10xi32>
    %10 = arith.extui %9 : vector<16x10xi1> to vector<16x10xi32>
    %11 = arith.sitofp %10 : vector<16x10xi32> to vector<16x10xf32>
    %c0_3 = arith.constant 0 : index
    %c0_4 = arith.constant 0 : index
    %12 = vector.load %arg3[%c0_3, %c0_4] : memref<8x32xf32, #tpu.memory_space<vmem>>, vector<8x32xf32>
    %cst = arith.constant dense<0.000000e+00> : vector<16x32xf32>
    %13 = tpu.matmul %7, %12, %cst {dimension_numbers = #tpu.dot_dimension_numbers<[1], [0], [0], [1], [0, 0, 1, 1], [], []>} : vector<16x8xf32>, vector<8x32xf32>, vector<16x32xf32> -> vector<16x32xf32>
    %c0_5 = arith.constant 0 : index
    %c0_6 = arith.constant 0 : index
    %14 = vector.load %arg4[%c0_5, %c0_6] : memref<10x32xf32, #tpu.memory_space<vmem>>, vector<10x32xf32>
    %cst_7 = arith.constant dense<0.000000e+00> : vector<16x32xf32>
    %15 = tpu.matmul %11, %14, %cst_7 {dimension_numbers = #tpu.dot_dimension_numbers<[1], [0], [0], [1], [0, 0, 1, 1], [], []>} : vector<16x10xf32>, vector<10x32xf32>, vector<16x32xf32> -> vector<16x32xf32>
    %c0_8 = arith.constant 0 : index
    %c0_9 = arith.constant 0 : index
    %16 = vector.load %arg5[%c0_8, %c0_9] : memref<32x360xf32, #tpu.memory_space<vmem>>, vector<32x360xf32>
    %cst_10 = arith.constant dense<0.000000e+00> : vector<16x360xf32>
    %17 = tpu.matmul %13, %16, %cst_10 {dimension_numbers = #tpu.dot_dimension_numbers<[1], [0], [0], [1], [0, 0, 1, 1], [], []>} : vector<16x32xf32>, vector<32x360xf32>, vector<16x360xf32> -> vector<16x360xf32>
    %c0_11 = arith.constant 0 : index
    %c0_12 = arith.constant 0 : index
    %18 = vector.load %arg6[%c0_11, %c0_12] : memref<32x360xf32, #tpu.memory_space<vmem>>, vector<32x360xf32>
    %cst_13 = arith.constant dense<0.000000e+00> : vector<16x360xf32>
    %19 = tpu.matmul %15, %18, %cst_13 {dimension_numbers = #tpu.dot_dimension_numbers<[1], [0], [0], [1], [0, 0, 1, 1], [], []>} : vector<16x32xf32>, vector<32x360xf32>, vector<16x360xf32> -> vector<16x360xf32>
    %20 = arith.addf %17, %19 : vector<16x360xf32>
    %c0_14 = arith.constant 0 : index
    %c0_15 = arith.constant 0 : index
    %21 = vector.load %arg7[%c0_14, %c0_15] : memref<1x360xf32, #tpu.memory_space<vmem>>, vector<1x360xf32>
    %22 = vector.broadcast %21 : vector<1x360xf32> to vector<16x360xf32>
    %23 = arith.addf %20, %22 : vector<16x360xf32>
    %cst_16 = arith.constant 0.000000e+00 : f32
    %24 = vector.broadcast %cst_16 : f32 to vector<16x360xf32>
    %25 = arith.maximumf %23, %24 : vector<16x360xf32>
    %c0_17 = arith.constant 0 : index
    %c0_18 = arith.constant 0 : index
    %26 = vector.load %arg8[%c0_17, %c0_18] : memref<360x200xf32, #tpu.memory_space<vmem>>, vector<360x200xf32>
    %cst_19 = arith.constant dense<0.000000e+00> : vector<16x200xf32>
    %27 = tpu.matmul %25, %26, %cst_19 {dimension_numbers = #tpu.dot_dimension_numbers<[1], [0], [0], [1], [0, 0, 1, 1], [], []>} : vector<16x360xf32>, vector<360x200xf32>, vector<16x200xf32> -> vector<16x200xf32>
    %c0_20 = arith.constant 0 : index
    %c0_21 = arith.constant 0 : index
    %28 = vector.load %arg9[%c0_20, %c0_21] : memref<1x200xf32, #tpu.memory_space<vmem>>, vector<1x200xf32>
    %29 = vector.broadcast %28 : vector<1x200xf32> to vector<16x200xf32>
    %30 = arith.addf %27, %29 : vector<16x200xf32>
    %cst_22 = arith.constant 0.000000e+00 : f32
    %31 = vector.broadcast %cst_22 : f32 to vector<16x200xf32>
    %32 = arith.maximumf %30, %31 : vector<16x200xf32>
    %c0_23 = arith.constant 0 : index
    %c0_24 = arith.constant 0 : index
    %33 = vector.load %arg10[%c0_23, %c0_24] : memref<200x80xf32, #tpu.memory_space<vmem>>, vector<200x80xf32>
    %cst_25 = arith.constant dense<0.000000e+00> : vector<16x80xf32>
    %34 = tpu.matmul %32, %33, %cst_25 {dimension_numbers = #tpu.dot_dimension_numbers<[1], [0], [0], [1], [0, 0, 1, 1], [], []>} : vector<16x200xf32>, vector<200x80xf32>, vector<16x80xf32> -> vector<16x80xf32>
    %c0_26 = arith.constant 0 : index
    %c0_27 = arith.constant 0 : index
    %35 = vector.load %arg11[%c0_26, %c0_27] : memref<1x80xf32, #tpu.memory_space<vmem>>, vector<1x80xf32>
    %36 = vector.broadcast %35 : vector<1x80xf32> to vector<16x80xf32>
    %37 = arith.addf %34, %36 : vector<16x80xf32>
    %cst_28 = arith.constant 0.000000e+00 : f32
    %38 = vector.broadcast %cst_28 : f32 to vector<16x80xf32>
    %39 = arith.maximumf %37, %38 : vector<16x80xf32>
    %c0_29 = arith.constant 0 : index
    %c0_30 = arith.constant 0 : index
    %40 = vector.load %arg12[%c0_29, %c0_30] : memref<80x2xf32, #tpu.memory_space<vmem>>, vector<80x2xf32>
    %cst_31 = arith.constant dense<0.000000e+00> : vector<16x2xf32>
    %41 = tpu.matmul %39, %40, %cst_31 {dimension_numbers = #tpu.dot_dimension_numbers<[1], [0], [0], [1], [0, 0, 1, 1], [], []>} : vector<16x80xf32>, vector<80x2xf32>, vector<16x2xf32> -> vector<16x2xf32>
    %c0_32 = arith.constant 0 : index
    %c0_33 = arith.constant 0 : index
    %42 = vector.load %arg13[%c0_32, %c0_33] : memref<1x2xf32, #tpu.memory_space<vmem>>, vector<1x2xf32>
    %43 = vector.broadcast %42 : vector<1x2xf32> to vector<16x2xf32>
    %44 = arith.addf %41, %43 : vector<16x2xf32>
    %cst_34 = arith.constant 0.000000e+00 : f32
    %45 = vector.broadcast %cst_34 : f32 to vector<16x2xf32>
    %46 = arith.maximumf %44, %45 : vector<16x2xf32>
    %c0_35 = arith.constant 0 : index
    %c0_36 = arith.constant 0 : index
    %47 = vector.load %arg14[%c0_35, %c0_36] : memref<2x1xf32, #tpu.memory_space<vmem>>, vector<2x1xf32>
    %cst_37 = arith.constant dense<0.000000e+00> : vector<16x1xf32>
    %48 = tpu.matmul %46, %47, %cst_37 {dimension_numbers = #tpu.dot_dimension_numbers<[1], [0], [0], [1], [0, 0, 1, 1], [], []>} : vector<16x2xf32>, vector<2x1xf32>, vector<16x1xf32> -> vector<16x1xf32>
    %c0_38 = arith.constant 0 : index
    %c0_39 = arith.constant 0 : index
    %49 = vector.load %arg15[%c0_38, %c0_39] : memref<1x1xf32, #tpu.memory_space<vmem>>, vector<1x1xf32>
    %50 = vector.broadcast %49 : vector<1x1xf32> to vector<16x1xf32>
    %51 = arith.addf %48, %50 : vector<16x1xf32>
    %c0_40 = arith.constant 0 : index
    %c0_41 = arith.constant 0 : index
    %52 = vector.load %arg16[%c0_40, %c0_41] : memref<32x360xf32, #tpu.memory_space<vmem>>, vector<32x360xf32>
    %cst_42 = arith.constant dense<0.000000e+00> : vector<16x360xf32>
    %53 = tpu.matmul %13, %52, %cst_42 {dimension_numbers = #tpu.dot_dimension_numbers<[1], [0], [0], [1], [0, 0, 1, 1], [], []>} : vector<16x32xf32>, vector<32x360xf32>, vector<16x360xf32> -> vector<16x360xf32>
    %c0_43 = arith.constant 0 : index
    %c0_44 = arith.constant 0 : index
    %54 = vector.load %arg17[%c0_43, %c0_44] : memref<32x360xf32, #tpu.memory_space<vmem>>, vector<32x360xf32>
    %cst_45 = arith.constant dense<0.000000e+00> : vector<16x360xf32>
    %55 = tpu.matmul %15, %54, %cst_45 {dimension_numbers = #tpu.dot_dimension_numbers<[1], [0], [0], [1], [0, 0, 1, 1], [], []>} : vector<16x32xf32>, vector<32x360xf32>, vector<16x360xf32> -> vector<16x360xf32>
    %56 = arith.addf %53, %55 : vector<16x360xf32>
    %c0_46 = arith.constant 0 : index
    %c0_47 = arith.constant 0 : index
    %57 = vector.load %arg18[%c0_46, %c0_47] : memref<1x360xf32, #tpu.memory_space<vmem>>, vector<1x360xf32>
    %58 = vector.broadcast %57 : vector<1x360xf32> to vector<16x360xf32>
    %59 = arith.addf %56, %58 : vector<16x360xf32>
    %cst_48 = arith.constant 0.000000e+00 : f32
    %60 = vector.broadcast %cst_48 : f32 to vector<16x360xf32>
    %61 = arith.maximumf %59, %60 : vector<16x360xf32>
    %c0_49 = arith.constant 0 : index
    %c0_50 = arith.constant 0 : index
    %62 = vector.load %arg19[%c0_49, %c0_50] : memref<360x200xf32, #tpu.memory_space<vmem>>, vector<360x200xf32>
    %cst_51 = arith.constant dense<0.000000e+00> : vector<16x200xf32>
    %63 = tpu.matmul %61, %62, %cst_51 {dimension_numbers = #tpu.dot_dimension_numbers<[1], [0], [0], [1], [0, 0, 1, 1], [], []>} : vector<16x360xf32>, vector<360x200xf32>, vector<16x200xf32> -> vector<16x200xf32>
    %c0_52 = arith.constant 0 : index
    %c0_53 = arith.constant 0 : index
    %64 = vector.load %arg20[%c0_52, %c0_53] : memref<1x200xf32, #tpu.memory_space<vmem>>, vector<1x200xf32>
    %65 = vector.broadcast %64 : vector<1x200xf32> to vector<16x200xf32>
    %66 = arith.addf %63, %65 : vector<16x200xf32>
    %cst_54 = arith.constant 0.000000e+00 : f32
    %67 = vector.broadcast %cst_54 : f32 to vector<16x200xf32>
    %68 = arith.maximumf %66, %67 : vector<16x200xf32>
    %c0_55 = arith.constant 0 : index
    %c0_56 = arith.constant 0 : index
    %69 = vector.load %arg21[%c0_55, %c0_56] : memref<200x80xf32, #tpu.memory_space<vmem>>, vector<200x80xf32>
    %cst_57 = arith.constant dense<0.000000e+00> : vector<16x80xf32>
    %70 = tpu.matmul %68, %69, %cst_57 {dimension_numbers = #tpu.dot_dimension_numbers<[1], [0], [0], [1], [0, 0, 1, 1], [], []>} : vector<16x200xf32>, vector<200x80xf32>, vector<16x80xf32> -> vector<16x80xf32>
    %c0_58 = arith.constant 0 : index
    %c0_59 = arith.constant 0 : index
    %71 = vector.load %arg22[%c0_58, %c0_59] : memref<1x80xf32, #tpu.memory_space<vmem>>, vector<1x80xf32>
    %72 = vector.broadcast %71 : vector<1x80xf32> to vector<16x80xf32>
    %73 = arith.addf %70, %72 : vector<16x80xf32>
    %cst_60 = arith.constant 0.000000e+00 : f32
    %74 = vector.broadcast %cst_60 : f32 to vector<16x80xf32>
    %75 = arith.maximumf %73, %74 : vector<16x80xf32>
    %c0_61 = arith.constant 0 : index
    %c0_62 = arith.constant 0 : index
    %76 = vector.load %arg23[%c0_61, %c0_62] : memref<80x2xf32, #tpu.memory_space<vmem>>, vector<80x2xf32>
    %cst_63 = arith.constant dense<0.000000e+00> : vector<16x2xf32>
    %77 = tpu.matmul %75, %76, %cst_63 {dimension_numbers = #tpu.dot_dimension_numbers<[1], [0], [0], [1], [0, 0, 1, 1], [], []>} : vector<16x80xf32>, vector<80x2xf32>, vector<16x2xf32> -> vector<16x2xf32>
    %c0_64 = arith.constant 0 : index
    %c0_65 = arith.constant 0 : index
    %78 = vector.load %arg24[%c0_64, %c0_65] : memref<1x2xf32, #tpu.memory_space<vmem>>, vector<1x2xf32>
    %79 = vector.broadcast %78 : vector<1x2xf32> to vector<16x2xf32>
    %80 = arith.addf %77, %79 : vector<16x2xf32>
    %cst_66 = arith.constant 0.000000e+00 : f32
    %81 = vector.broadcast %cst_66 : f32 to vector<16x2xf32>
    %82 = arith.maximumf %80, %81 : vector<16x2xf32>
    %c0_67 = arith.constant 0 : index
    %c0_68 = arith.constant 0 : index
    %83 = vector.load %arg25[%c0_67, %c0_68] : memref<2x1xf32, #tpu.memory_space<vmem>>, vector<2x1xf32>
    %cst_69 = arith.constant dense<0.000000e+00> : vector<16x1xf32>
    %84 = tpu.matmul %82, %83, %cst_69 {dimension_numbers = #tpu.dot_dimension_numbers<[1], [0], [0], [1], [0, 0, 1, 1], [], []>} : vector<16x2xf32>, vector<2x1xf32>, vector<16x1xf32> -> vector<16x1xf32>
    %c0_70 = arith.constant 0 : index
    %c0_71 = arith.constant 0 : index
    %85 = vector.load %arg26[%c0_70, %c0_71] : memref<1x1xf32, #tpu.memory_space<vmem>>, vector<1x1xf32>
    %86 = vector.broadcast %85 : vector<1x1xf32> to vector<16x1xf32>
    %87 = arith.addf %84, %86 : vector<16x1xf32>
    %88 = arith.negf %87 : vector<16x1xf32>
    %89 = math.exp %88 : vector<16x1xf32>
    %cst_72 = arith.constant 1.000000e+00 : f32
    %90 = vector.broadcast %cst_72 : f32 to vector<16x1xf32>
    %91 = arith.addf %90, %89 : vector<16x1xf32>
    %92 = arith.divf %90, %91 : vector<16x1xf32>
    %93 = arith.negf %51 : vector<16x1xf32>
    %94 = math.exp %93 : vector<16x1xf32>
    %cst_73 = arith.constant 1.000000e+00 : f32
    %95 = vector.broadcast %cst_73 : f32 to vector<16x1xf32>
    %96 = arith.addf %95, %94 : vector<16x1xf32>
    %97 = arith.divf %95, %96 : vector<16x1xf32>
    %98 = arith.mulf %92, %97 : vector<16x1xf32>
    %c0_74 = arith.constant 0 : index
    %c0_75 = arith.constant 0 : index
    %99 = vector.load %arg27[%c0_74, %c0_75] : memref<16x3xf32, #tpu.memory_space<vmem>>, vector<16x1xf32>
    tpu.vector_store %arg27[%c0_74, %c0_75], %51 {strides = array<i32>} : memref<16x3xf32, #tpu.memory_space<vmem>>, vector<16x1xf32>,
    %c0_76 = arith.constant 0 : index
    %c1 = arith.constant 1 : index
    %100 = vector.load %arg27[%c0_76, %c1] : memref<16x3xf32, #tpu.memory_space<vmem>>, vector<16x1xf32>
    tpu.vector_store %arg27[%c0_76, %c1], %87 {strides = array<i32>} : memref<16x3xf32, #tpu.memory_space<vmem>>, vector<16x1xf32>,
    %c0_77 = arith.constant 0 : index
    %c2 = arith.constant 2 : index
    %101 = vector.load %arg27[%c0_77, %c2] : memref<16x3xf32, #tpu.memory_space<vmem>>, vector<16x1xf32>
    tpu.vector_store %arg27[%c0_77, %c2], %98 {strides = array<i32>} : memref<16x3xf32, #tpu.memory_space<vmem>>, vector<16x1xf32>,
    return
  }
  func.func @transform_0(%arg0: i32) -> (i32, i32) {
    %c0_i32 = arith.constant 0 : i32
    %c0_i32_0 = arith.constant 0 : i32
    return %arg0, %c0_i32 : i32, i32
  }
  func.func @transform_1(%arg0: i32) -> (i32, i32) {
    %c0_i32 = arith.constant 0 : i32
    %c0_i32_0 = arith.constant 0 : i32
    return %arg0, %c0_i32 : i32, i32
  }
  func.func @transform_2(%arg0: i32) -> (i32, i32) {
    %c0_i32 = arith.constant 0 : i32
    %c0_i32_0 = arith.constant 0 : i32
    %c0_i32_1 = arith.constant 0 : i32
    return %c0_i32, %c0_i32_0 : i32, i32
  }
  func.func @transform_3(%arg0: i32) -> (i32, i32) {
    %c0_i32 = arith.constant 0 : i32
    %c0_i32_0 = arith.constant 0 : i32
    %c0_i32_1 = arith.constant 0 : i32
    return %c0_i32, %c0_i32_0 : i32, i32
  }
  func.func @transform_4(%arg0: i32) -> (i32, i32) {
    %c0_i32 = arith.constant 0 : i32
    %c0_i32_0 = arith.constant 0 : i32
    %c0_i32_1 = arith.constant 0 : i32
    return %c0_i32, %c0_i32_0 : i32, i32
  }
  func.func @transform_5(%arg0: i32) -> (i32, i32) {
    %c0_i32 = arith.constant 0 : i32
    %c0_i32_0 = arith.constant 0 : i32
    %c0_i32_1 = arith.constant 0 : i32
    return %c0_i32, %c0_i32_0 : i32, i32
  }
  func.func @transform_6(%arg0: i32) -> (i32, i32) {
    %c0_i32 = arith.constant 0 : i32
    %c0_i32_0 = arith.constant 0 : i32
    %c0_i32_1 = arith.constant 0 : i32
    return %c0_i32, %c0_i32_0 : i32, i32
  }
  func.func @transform_7(%arg0: i32) -> (i32, i32) {
    %c0_i32 = arith.constant 0 : i32
    %c0_i32_0 = arith.constant 0 : i32
    %c0_i32_1 = arith.constant 0 : i32
    return %c0_i32, %c0_i32_0 : i32, i32
  }
  func.func @transform_8(%arg0: i32) -> (i32, i32) {
    %c0_i32 = arith.constant 0 : i32
    %c0_i32_0 = arith.constant 0 : i32
    %c0_i32_1 = arith.constant 0 : i32
    return %c0_i32, %c0_i32_0 : i32, i32
  }
  func.func @transform_9(%arg0: i32) -> (i32, i32) {
    %c0_i32 = arith.constant 0 : i32
    %c0_i32_0 = arith.constant 0 : i32
    %c0_i32_1 = arith.constant 0 : i32
    return %c0_i32, %c0_i32_0 : i32, i32
  }
  func.func @transform_10(%arg0: i32) -> (i32, i32) {
    %c0_i32 = arith.constant 0 : i32
    %c0_i32_0 = arith.constant 0 : i32
    %c0_i32_1 = arith.constant 0 : i32
    return %c0_i32, %c0_i32_0 : i32, i32
  }
  func.func @transform_11(%arg0: i32) -> (i32, i32) {
    %c0_i32 = arith.constant 0 : i32
    %c0_i32_0 = arith.constant 0 : i32
    %c0_i32_1 = arith.constant 0 : i32
    return %c0_i32, %c0_i32_0 : i32, i32
  }
  func.func @transform_12(%arg0: i32) -> (i32, i32) {
    %c0_i32 = arith.constant 0 : i32
    %c0_i32_0 = arith.constant 0 : i32
    %c0_i32_1 = arith.constant 0 : i32
    return %c0_i32, %c0_i32_0 : i32, i32
  }
  func.func @transform_13(%arg0: i32) -> (i32, i32) {
    %c0_i32 = arith.constant 0 : i32
    %c0_i32_0 = arith.constant 0 : i32
    %c0_i32_1 = arith.constant 0 : i32
    return %c0_i32, %c0_i32_0 : i32, i32
  }
  func.func @transform_14(%arg0: i32) -> (i32, i32) {
    %c0_i32 = arith.constant 0 : i32
    %c0_i32_0 = arith.constant 0 : i32
    %c0_i32_1 = arith.constant 0 : i32
    return %c0_i32, %c0_i32_0 : i32, i32
  }
  func.func @transform_15(%arg0: i32) -> (i32, i32) {
    %c0_i32 = arith.constant 0 : i32
    %c0_i32_0 = arith.constant 0 : i32
    %c0_i32_1 = arith.constant 0 : i32
    return %c0_i32, %c0_i32_0 : i32, i32
  }
  func.func @transform_16(%arg0: i32) -> (i32, i32) {
    %c0_i32 = arith.constant 0 : i32
    %c0_i32_0 = arith.constant 0 : i32
    %c0_i32_1 = arith.constant 0 : i32
    return %c0_i32, %c0_i32_0 : i32, i32
  }
  func.func @transform_17(%arg0: i32) -> (i32, i32) {
    %c0_i32 = arith.constant 0 : i32
    %c0_i32_0 = arith.constant 0 : i32
    %c0_i32_1 = arith.constant 0 : i32
    return %c0_i32, %c0_i32_0 : i32, i32
  }
  func.func @transform_18(%arg0: i32) -> (i32, i32) {
    %c0_i32 = arith.constant 0 : i32
    %c0_i32_0 = arith.constant 0 : i32
    %c0_i32_1 = arith.constant 0 : i32
    return %c0_i32, %c0_i32_0 : i32, i32
  }
  func.func @transform_19(%arg0: i32) -> (i32, i32) {
    %c0_i32 = arith.constant 0 : i32
    %c0_i32_0 = arith.constant 0 : i32
    %c0_i32_1 = arith.constant 0 : i32
    return %c0_i32, %c0_i32_0 : i32, i32
  }
  func.func @transform_20(%arg0: i32) -> (i32, i32) {
    %c0_i32 = arith.constant 0 : i32
    %c0_i32_0 = arith.constant 0 : i32
    %c0_i32_1 = arith.constant 0 : i32
    return %c0_i32, %c0_i32_0 : i32, i32
  }
  func.func @transform_21(%arg0: i32) -> (i32, i32) {
    %c0_i32 = arith.constant 0 : i32
    %c0_i32_0 = arith.constant 0 : i32
    %c0_i32_1 = arith.constant 0 : i32
    return %c0_i32, %c0_i32_0 : i32, i32
  }
  func.func @transform_22(%arg0: i32) -> (i32, i32) {
    %c0_i32 = arith.constant 0 : i32
    %c0_i32_0 = arith.constant 0 : i32
    %c0_i32_1 = arith.constant 0 : i32
    return %c0_i32, %c0_i32_0 : i32, i32
  }
  func.func @transform_23(%arg0: i32) -> (i32, i32) {
    %c0_i32 = arith.constant 0 : i32
    %c0_i32_0 = arith.constant 0 : i32
    %c0_i32_1 = arith.constant 0 : i32
    return %c0_i32, %c0_i32_0 : i32, i32
  }
  func.func @transform_24(%arg0: i32) -> (i32, i32) {
    %c0_i32 = arith.constant 0 : i32
    %c0_i32_0 = arith.constant 0 : i32
    %c0_i32_1 = arith.constant 0 : i32
    return %c0_i32, %c0_i32_0 : i32, i32
  }
  func.func @transform_25(%arg0: i32) -> (i32, i32) {
    %c0_i32 = arith.constant 0 : i32
    %c0_i32_0 = arith.constant 0 : i32
    %c0_i32_1 = arith.constant 0 : i32
    return %c0_i32, %c0_i32_0 : i32, i32
  }
  func.func @transform_26(%arg0: i32) -> (i32, i32) {
    %c0_i32 = arith.constant 0 : i32
    %c0_i32_0 = arith.constant 0 : i32
    return %arg0, %c0_i32 : i32, i32
  }
}

</mosaic_0001>

<llo_original>
// kernel: tpu_custom_call.1
$region0: #{tpu_custom_call.1}
  #allocation0 [shape = 'u32[]', space=smem, size = 0x4, offset = 0x4, fixed_abs, tag = 'smem constant byte address 0x4 - core index']
  #allocation1 [shape = 'u32[144,128]{1,0:T(1,128)}', space=vmem, size = 0x12000, scoped, tag = 'internal scratch']
  #allocation2 [shape = 'f32[1,1]{1,0:T(1,128)S(1)}', space=vmem, size = 0x200, scoped, tag = 'scoped memory for tpu_custom_call.1']
  #allocation3 [shape = 'f32[1,1]{1,0:T(1,128)S(1)}', space=vmem, size = 0x200, scoped, tag = 'scoped memory for tpu_custom_call.1']
  %s0 = inlined_call_operand.vmem [shape: s32[16,1], index: 0, kind: input, shape index: {}]
  %s1 = inlined_call_operand.vmem [shape: s32[16,1], index: 1, kind: input, shape index: {}]
  %s2 = inlined_call_operand.vmem [shape: f32[8,32], index: 2, kind: input, shape index: {}]
  %s3 = inlined_call_operand.vmem [shape: f32[10,32], index: 3, kind: input, shape index: {}]
  %s4 = inlined_call_operand.vmem [shape: f32[32,360], index: 4, kind: input, shape index: {}]
  %s5 = inlined_call_operand.vmem [shape: f32[32,360], index: 5, kind: input, shape index: {}]
  %s6 = inlined_call_operand.vmem [shape: f32[1,360], index: 6, kind: input, shape index: {}]
  %s7 = inlined_call_operand.vmem [shape: f32[360,200], index: 7, kind: input, shape index: {}]
  %s8 = inlined_call_operand.vmem [shape: f32[1,200], index: 8, kind: input, shape index: {}]
  %s9 = inlined_call_operand.vmem [shape: f32[200,80], index: 9, kind: input, shape index: {}]
  %s10 = inlined_call_operand.vmem [shape: f32[1,80], index: 10, kind: input, shape index: {}]
  %s11 = inlined_call_operand.vmem [shape: f32[80,2], index: 11, kind: input, shape index: {}]
  %s12 = inlined_call_operand.vmem [shape: f32[1,2], index: 12, kind: input, shape index: {}]
  %s13 = inlined_call_operand.vmem [shape: f32[2,1], index: 13, kind: input, shape index: {}]
  %s14 = inlined_call_operand.<no memory space> [shape: f32[1,1], index: 14, kind: input, shape index: {}]
  %s15 = inlined_call_operand.vmem [shape: f32[32,360], index: 15, kind: input, shape index: {}]
  %s16 = inlined_call_operand.vmem [shape: f32[32,360], index: 16, kind: input, shape index: {}]
  %s17 = inlined_call_operand.vmem [shape: f32[1,360], index: 17, kind: input, shape index: {}]
  %s18 = inlined_call_operand.vmem [shape: f32[360,200], index: 18, kind: input, shape index: {}]
  %s19 = inlined_call_operand.vmem [shape: f32[1,200], index: 19, kind: input, shape index: {}]
  %s20 = inlined_call_operand.vmem [shape: f32[200,80], index: 20, kind: input, shape index: {}]
  %s21 = inlined_call_operand.vmem [shape: f32[1,80], index: 21, kind: input, shape index: {}]
  %s22 = inlined_call_operand.vmem [shape: f32[80,2], index: 22, kind: input, shape index: {}]
  %s23 = inlined_call_operand.vmem [shape: f32[1,2], index: 23, kind: input, shape index: {}]
  %s24 = inlined_call_operand.vmem [shape: f32[2,1], index: 24, kind: input, shape index: {}]
  %s25 = inlined_call_operand.<no memory space> [shape: f32[1,1], index: 25, kind: input, shape index: {}]
  %s26 = inlined_call_operand.vmem [shape: f32[16,3], index: 26, kind: output, shape index: {}]
  %s27 = sld [smem:[#allocation0]]
  $region114: #{tpu_custom_call.1} parent=0
    _
  %s29 = ssub.s32 1, %s27
  %s30 = scalar_select 0, %s29, %s27
  %v31 = vstv %s14
  %32 = vst [vmem:[#allocation2] sm:$0x1] %v31
  %v33 = vstv %s25
  %34 = vst [vmem:[#allocation3] sm:$0x1] %v33
  // Predicated region
  $region2: #{tpu_custom_call.1} parent=0 // pred_check
    _
  $region3: #{tpu_custom_call.1} parent=0 // pred_check_branch
    %36 = sbr.rel (0) target = $region5
  $region4: #{tpu_custom_call.1} parent=0 // pred_region
    _
  $region5: #{tpu_custom_call.1} parent=0 // pred_fallthru
    _
  // Predicated region
  $region6: #{tpu_custom_call.1} parent=0 // pred_check
    _
  $region7: #{tpu_custom_call.1} parent=0 // pred_check_branch
    %38 = sbr.rel (0) target = $region9
  $region8: #{tpu_custom_call.1} parent=0 // pred_region
    _
  $region9: #{tpu_custom_call.1} parent=0 // pred_fallthru
    _
  // Predicated region
  $region10: #{tpu_custom_call.1} parent=0 // pred_check
    _
  $region11: #{tpu_custom_call.1} parent=0 // pred_check_branch
    %40 = sbr.rel (0) target = $region13
  $region12: #{tpu_custom_call.1} parent=0 // pred_region
    _
  $region13: #{tpu_custom_call.1} parent=0 // pred_fallthru
    _
  // Predicated region
  $region14: #{tpu_custom_call.1} parent=0 // pred_check
    _
  $region15: #{tpu_custom_call.1} parent=0 // pred_check_branch
    %42 = sbr.rel (0) target = $region17
  $region16: #{tpu_custom_call.1} parent=0 // pred_region
    _
  $region17: #{tpu_custom_call.1} parent=0 // pred_fallthru
    _
  // Predicated region
  $region18: #{tpu_custom_call.1} parent=0 // pred_check
    _
  $region19: #{tpu_custom_call.1} parent=0 // pred_check_branch
    %44 = sbr.rel (0) target = $region21
  $region20: #{tpu_custom_call.1} parent=0 // pred_region
    _
  $region21: #{tpu_custom_call.1} parent=0 // pred_fallthru
    _
  // Predicated region
  $region22: #{tpu_custom_call.1} parent=0 // pred_check
    _
  $region23: #{tpu_custom_call.1} parent=0 // pred_check_branch
    %46 = sbr.rel (0) target = $region25
  $region24: #{tpu_custom_call.1} parent=0 // pred_region
    _
  $region25: #{tpu_custom_call.1} parent=0 // pred_fallthru
    _
  // Predicated region
  $region26: #{tpu_custom_call.1} parent=0 // pred_check
    _
  $region27: #{tpu_custom_call.1} parent=0 // pred_check_branch
    %48 = sbr.rel (0) target = $region29
  $region28: #{tpu_custom_call.1} parent=0 // pred_region
    _
  $region29: #{tpu_custom_call.1} parent=0 // pred_fallthru
    _
  // Predicated region
  $region30: #{tpu_custom_call.1} parent=0 // pred_check
    _
  $region31: #{tpu_custom_call.1} parent=0 // pred_check_branch
    %50 = sbr.rel (0) target = $region33
  $region32: #{tpu_custom_call.1} parent=0 // pred_region
    _
  $region33: #{tpu_custom_call.1} parent=0 // pred_fallthru
    _
  // Predicated region
  $region34: #{tpu_custom_call.1} parent=0 // pred_check
    _
  $region35: #{tpu_custom_call.1} parent=0 // pred_check_branch
    %52 = sbr.rel (0) target = $region37
  $region36: #{tpu_custom_call.1} parent=0 // pred_region
    _
  $region37: #{tpu_custom_call.1} parent=0 // pred_fallthru
    _
  // Predicated region
  $region38: #{tpu_custom_call.1} parent=0 // pred_check
    _
  $region39: #{tpu_custom_call.1} parent=0 // pred_check_branch
    %54 = sbr.rel (0) target = $region41
  $region40: #{tpu_custom_call.1} parent=0 // pred_region
    _
  $region41: #{tpu_custom_call.1} parent=0 // pred_fallthru
    _
  // Predicated region
  $region42: #{tpu_custom_call.1} parent=0 // pred_check
    _
  $region43: #{tpu_custom_call.1} parent=0 // pred_check_branch
    %56 = sbr.rel (0) target = $region45
  $region44: #{tpu_custom_call.1} parent=0 // pred_region
    _
  $region45: #{tpu_custom_call.1} parent=0 // pred_fallthru
    _
  // Predicated region
  $region46: #{tpu_custom_call.1} parent=0 // pred_check
    _
  $region47: #{tpu_custom_call.1} parent=0 // pred_check_branch
    %58 = sbr.rel (0) target = $region49
  $region48: #{tpu_custom_call.1} parent=0 // pred_region
    _
  $region49: #{tpu_custom_call.1} parent=0 // pred_fallthru
    _
  // Predicated region
  $region50: #{tpu_custom_call.1} parent=0 // pred_check
    _
  $region51: #{tpu_custom_call.1} parent=0 // pred_check_branch
    %60 = sbr.rel (0) target = $region53
  $region52: #{tpu_custom_call.1} parent=0 // pred_region
    _
  $region53: #{tpu_custom_call.1} parent=0 // pred_fallthru
    _
  // Predicated region
  $region54: #{tpu_custom_call.1} parent=0 // pred_check
    _
  $region55: #{tpu_custom_call.1} parent=0 // pred_check_branch
    %62 = sbr.rel (0) target = $region57
  $region56: #{tpu_custom_call.1} parent=0 // pred_region
    _
  $region57: #{tpu_custom_call.1} parent=0 // pred_fallthru
    _
  // Predicated region
  $region58: #{tpu_custom_call.1} parent=0 // pred_check
    _
  $region59: #{tpu_custom_call.1} parent=0 // pred_check_branch
    %64 = sbr.rel (0) target = $region61
  $region60: #{tpu_custom_call.1} parent=0 // pred_region
    _
  $region61: #{tpu_custom_call.1} parent=0 // pred_fallthru
    _
  // Predicated region
  $region62: #{tpu_custom_call.1} parent=0 // pred_check
    _
  $region63: #{tpu_custom_call.1} parent=0 // pred_check_branch
    %66 = sbr.rel (0) target = $region65
  $region64: #{tpu_custom_call.1} parent=0 // pred_region
    _
  $region65: #{tpu_custom_call.1} parent=0 // pred_fallthru
    _
  // Predicated region
  $region66: #{tpu_custom_call.1} parent=0 // pred_check
    _
  $region67: #{tpu_custom_call.1} parent=0 // pred_check_branch
    %68 = sbr.rel (0) target = $region69
  $region68: #{tpu_custom_call.1} parent=0 // pred_region
    _
  $region69: #{tpu_custom_call.1} parent=0 // pred_fallthru
    _
  // Predicated region
  $region70: #{tpu_custom_call.1} parent=0 // pred_check
    _
  $region71: #{tpu_custom_call.1} parent=0 // pred_check_branch
    %70 = sbr.rel (0) target = $region73
  $region72: #{tpu_custom_call.1} parent=0 // pred_region
    _
  $region73: #{tpu_custom_call.1} parent=0 // pred_fallthru
    _
  // Predicated region
  $region74: #{tpu_custom_call.1} parent=0 // pred_check
    _
  $region75: #{tpu_custom_call.1} parent=0 // pred_check_branch
    %72 = sbr.rel (0) target = $region77
  $region76: #{tpu_custom_call.1} parent=0 // pred_region
    _
  $region77: #{tpu_custom_call.1} parent=0 // pred_fallthru
    _
  // Predicated region
  $region78: #{tpu_custom_call.1} parent=0 // pred_check
    _
  $region79: #{tpu_custom_call.1} parent=0 // pred_check_branch
    %74 = sbr.rel (0) target = $region81
  $region80: #{tpu_custom_call.1} parent=0 // pred_region
    _
  $region81: #{tpu_custom_call.1} parent=0 // pred_fallthru
    _
  // Predicated region
  $region82: #{tpu_custom_call.1} parent=0 // pred_check
    _
  $region83: #{tpu_custom_call.1} parent=0 // pred_check_branch
    %76 = sbr.rel (0) target = $region85
  $region84: #{tpu_custom_call.1} parent=0 // pred_region
    _
  $region85: #{tpu_custom_call.1} parent=0 // pred_fallthru
    _
  // Predicated region
  $region86: #{tpu_custom_call.1} parent=0 // pred_check
    _
  $region87: #{tpu_custom_call.1} parent=0 // pred_check_branch
    %78 = sbr.rel (0) target = $region89
  $region88: #{tpu_custom_call.1} parent=0 // pred_region
    _
  $region89: #{tpu_custom_call.1} parent=0 // pred_fallthru
    _
  // Predicated region
  $region90: #{tpu_custom_call.1} parent=0 // pred_check
    _
  $region91: #{tpu_custom_call.1} parent=0 // pred_check_branch
    %80 = sbr.rel (0) target = $region93
  $region92: #{tpu_custom_call.1} parent=0 // pred_region
    _
  $region93: #{tpu_custom_call.1} parent=0 // pred_fallthru
    _
  // Predicated region
  $region94: #{tpu_custom_call.1} parent=0 // pred_check
    _
  $region95: #{tpu_custom_call.1} parent=0 // pred_check_branch
    %82 = sbr.rel (0) target = $region97
  $region96: #{tpu_custom_call.1} parent=0 // pred_region
    _
  $region97: #{tpu_custom_call.1} parent=0 // pred_fallthru
    _
  // Predicated region
  $region98: #{tpu_custom_call.1} parent=0 // pred_check
    _
  $region99: #{tpu_custom_call.1} parent=0 // pred_check_branch
    %84 = sbr.rel (0) target = $region101
  $region100: #{tpu_custom_call.1} parent=0 // pred_region
    _
  $region101: #{tpu_custom_call.1} parent=0 // pred_fallthru
    _
  // Predicated region
  $region102: #{tpu_custom_call.1} parent=0 // pred_check
    _
  $region103: #{tpu_custom_call.1} parent=0 // pred_check_branch
    %86 = sbr.rel (0) target = $region105
  $region104: #{tpu_custom_call.1} parent=0 // pred_region
    _
  $region105: #{tpu_custom_call.1} parent=0 // pred_fallthru
    _
  %v87 = vld [vmem:[%s0] sm:$0xff]
  %v88 = vld [vmem:[%s0 + $0x8] sm:$0xff]
  %v89 = vld [vmem:[%s1] sm:$0xff]
  %v90 = vld [vmem:[%s1 + $0x8] sm:$0xff]
  %v91 = vlaneseq
  %v92 = vand.u32 %v91, 127
  %93 = vset.pattern.permute.xlu0 0
  %94 = vperm.xlu0 %93, %v87
  %v95 = vpop.permute.xlu0 %94
  %96 = vset.pattern.permute.xlu0 0
  %97 = vperm.xlu0 %96, %v88
  %v98 = vpop.permute.xlu0 %97
  %vm99 = vcmp.eq.s32.totalorder %v95, %v92
  %vm100 = vcmp.eq.s32.totalorder %v98, %v92
  %v101 = vsel %vm99, 1, 0
  %v102 = vsel %vm100, 1, 0
  %v103 = vcvt.s32.f32 %v101
  %v104 = vcvt.s32.f32 %v102
  %105 = vset.pattern.permute.xlu0 0
  %106 = vperm.xlu0 %105, %v89
  %v107 = vpop.permute.xlu0 %106
  %108 = vset.pattern.permute.xlu0 0
  %109 = vperm.xlu0 %108, %v90
  %v110 = vpop.permute.xlu0 %109
  %vm111 = vcmp.eq.s32.totalorder %v107, %v92
  %vm112 = vcmp.eq.s32.totalorder %v110, %v92
  %v113 = vsel %vm111, 1, 0
  %v114 = vsel %vm112, 1, 0
  %v115 = vcvt.s32.f32 %v113
  %v116 = vcvt.s32.f32 %v114
  %v117 = vld [vmem:[%s2] sm:$0xff]
  %vm118 = vcmask 64512
  %v120 = vsel %vm118, %v103, 0
  %v123 = vsel %vm118, %v104, 0
  %125 = vmatprep.subr.mxu0 0.0
  %126 = vmatpush1.msra.mxu0 0.0
  %127 = vmatprep.subr.mxu0 0.0
  %128 = vmatpush1.msra.mxu0 0.0
  %129 = vmatprep.subr.mxu0 0.0
  %130 = vmatpush1.msra.mxu0 0.0
  %131 = vmatprep.subr.mxu0 0.0
  %132 = vmatpush1.msra.mxu0 0.0
  %133 = vmatprep.subr.mxu0 0.0
  %134 = vmatpush1.msra.mxu0 0.0
  %135 = vmatprep.subr.mxu0 0.0
  %136 = vmatpush1.msra.mxu0 0.0
  %137 = vmatprep.subr.mxu0 0.0
  %138 = vmatpush1.msra.mxu0 0.0
  %139 = vmatprep.subr.mxu0 0.0
  %140 = vmatpush1.msra.mxu0 0.0
  %141 = vmatprep.subr.mxu0 0.0
  %142 = vmatpush1.msra.mxu0 0.0
  %143 = vmatprep.subr.mxu0 0.0
  %144 = vmatpush1.msra.mxu0 0.0
  %145 = vmatprep.subr.mxu0 0.0
  %146 = vmatpush1.msra.mxu0 0.0
  %147 = vmatprep.subr.mxu0 0.0
  %148 = vmatpush1.msra.mxu0 0.0
  %149 = vmatprep.subr.mxu0 0.0
  %150 = vmatpush1.msra.mxu0 0.0
  %151 = vmatprep.subr.mxu0 0.0
  %152 = vmatpush1.msra.mxu0 0.0
  %153 = vmatprep.subr.mxu0 0.0
  %154 = vmatpush1.msra.mxu0 0.0
  %155 = vmatprep.subr.mxu0 0.0
  %156 = vmatpush1.msra.mxu0 %v117
  %157 = vmatprep.subr.mxu0 0.0
  %158 = vmatpush2.msra.mxu0 0.0
  %159 = vmatprep.subr.mxu0 0.0
  %160 = vmatpush2.msra.mxu0 0.0
  %161 = vmatprep.subr.mxu0 0.0
  %162 = vmatpush2.msra.mxu0 0.0
  %163 = vmatprep.subr.mxu0 0.0
  %164 = vmatpush2.msra.mxu0 0.0
  %165 = vmatprep.subr.mxu0 0.0
  %166 = vmatpush2.msra.mxu0 0.0
  %167 = vmatprep.subr.mxu0 0.0
  %168 = vmatpush2.msra.mxu0 0.0
  %169 = vmatprep.subr.mxu0 0.0
  %170 = vmatpush2.msra.mxu0 0.0
  %171 = vmatprep.subr.mxu0 0.0
  %172 = vmatpush2.msra.mxu0 0.0
  %173 = vmatprep.subr.mxu0 0.0
  %174 = vmatpush2.msra.mxu0 0.0
  %175 = vmatprep.subr.mxu0 0.0
  %176 = vmatpush2.msra.mxu0 0.0
  %177 = vmatprep.subr.mxu0 0.0
  %178 = vmatpush2.msra.mxu0 0.0
  %179 = vmatprep.subr.mxu0 0.0
  %180 = vmatpush2.msra.mxu0 0.0
  %181 = vmatprep.subr.mxu0 0.0
  %182 = vmatpush2.msra.mxu0 0.0
  %183 = vmatprep.subr.mxu0 0.0
  %184 = vmatpush2.msra.mxu0 0.0
  %185 = vmatprep.subr.mxu0 0.0
  %186 = vmatpush2.msra.mxu0 0.0
  %187 = vmatprep.subr.mxu0 0.0
  %188 = vmatpush2.msra.mxu0 0.0
  %189 = vmatprep.mubr.f32.mxu0 0.0
  %190 = vmatmul.mubr.f32.gmra.mxu0 %v120
  %v191 = vpop.f32.mrf.mxu0
  %v192 = vadd.f32 0.0, %v191
  %v193 = vpop.f32.mrf.mxu0
  %194 = vmatprep.mubr.f32.mxu0 0.0
  %195 = vmatmul.mubr.f32.gmra.mxu0 %v123
  %v196 = vpop.f32.mrf.mxu0
  %v197 = vadd.f32 0.0, %v196
  %v198 = vpop.f32.mrf.mxu0
  %199 = vdwg.mxu0
  %v200 = vld [vmem:[%s3] sm:$0xff]
  %v201 = vld [vmem:[%s3 + $0x8] sm:$0x3]
  %vm202 = vcmask 80896
  %v204 = vsel %vm202, %v115, 0
  %v207 = vsel %vm202, %v116, 0
  %vm209 = vcmask 1041408
  %v211 = vsel %vm209, %v201, 0
  %213 = vmatprep.subr.mxu0 0.0
  %214 = vmatpush1.msra.mxu0 0.0
  %215 = vmatprep.subr.mxu0 0.0
  %216 = vmatpush1.msra.mxu0 0.0
  %217 = vmatprep.subr.mxu0 0.0
  %218 = vmatpush1.msra.mxu0 0.0
  %219 = vmatprep.subr.mxu0 0.0
  %220 = vmatpush1.msra.mxu0 0.0
  %221 = vmatprep.subr.mxu0 0.0
  %222 = vmatpush1.msra.mxu0 0.0
  %223 = vmatprep.subr.mxu0 0.0
  %224 = vmatpush1.msra.mxu0 0.0
  %225 = vmatprep.subr.mxu0 0.0
  %226 = vmatpush1.msra.mxu0 0.0
  %227 = vmatprep.subr.mxu0 0.0
  %228 = vmatpush1.msra.mxu0 0.0
  %229 = vmatprep.subr.mxu0 0.0
  %230 = vmatpush1.msra.mxu0 0.0
  %231 = vmatprep.subr.mxu0 0.0
  %232 = vmatpush1.msra.mxu0 0.0
  %233 = vmatprep.subr.mxu0 0.0
  %234 = vmatpush1.msra.mxu0 0.0
  %235 = vmatprep.subr.mxu0 0.0
  %236 = vmatpush1.msra.mxu0 0.0
  %237 = vmatprep.subr.mxu0 0.0
  %238 = vmatpush1.msra.mxu0 0.0
  %239 = vmatprep.subr.mxu0 0.0
  %240 = vmatpush1.msra.mxu0 0.0
  %241 = vmatprep.subr.mxu0 0.0
  %242 = vmatpush1.msra.mxu0 %v211
  %243 = vmatprep.subr.mxu0 0.0
  %244 = vmatpush1.msra.mxu0 %v200
  %245 = vmatprep.subr.mxu0 0.0
  %246 = vmatpush2.msra.mxu0 0.0
  %247 = vmatprep.subr.mxu0 0.0
  %248 = vmatpush2.msra.mxu0 0.0
  %249 = vmatprep.subr.mxu0 0.0
  %250 = vmatpush2.msra.mxu0 0.0
  %251 = vmatprep.subr.mxu0 0.0
  %252 = vmatpush2.msra.mxu0 0.0
  %253 = vmatprep.subr.mxu0 0.0
  %254 = vmatpush2.msra.mxu0 0.0
  %255 = vmatprep.subr.mxu0 0.0
  %256 = vmatpush2.msra.mxu0 0.0
  %257 = vmatprep.subr.mxu0 0.0
  %258 = vmatpush2.msra.mxu0 0.0
  %259 = vmatprep.subr.mxu0 0.0
  %260 = vmatpush2.msra.mxu0 0.0
  %261 = vmatprep.subr.mxu0 0.0
  %262 = vmatpush2.msra.mxu0 0.0
  %263 = vmatprep.subr.mxu0 0.0
  %264 = vmatpush2.msra.mxu0 0.0
  %265 = vmatprep.subr.mxu0 0.0
  %266 = vmatpush2.msra.mxu0 0.0
  %267 = vmatprep.subr.mxu0 0.0
  %268 = vmatpush2.msra.mxu0 0.0
  %269 = vmatprep.subr.mxu0 0.0
  %270 = vmatpush2.msra.mxu0 0.0
  %271 = vmatprep.subr.mxu0 0.0
  %272 = vmatpush2.msra.mxu0 0.0
  %273 = vmatprep.subr.mxu0 0.0
  %274 = vmatpush2.msra.mxu0 0.0
  %275 = vmatprep.subr.mxu0 0.0
  %276 = vmatpush2.msra.mxu0 0.0
  %277 = vmatprep.mubr.f32.mxu0 0.0
  %278 = vmatmul.mubr.f32.gmra.mxu0 %v204
  %v279 = vpop.f32.mrf.mxu0
  %v280 = vadd.f32 0.0, %v279
  %v281 = vpop.f32.mrf.mxu0
  %282 = vmatprep.mubr.f32.mxu0 0.0
  %283 = vmatmul.mubr.f32.gmra.mxu0 %v207
  %v284 = vpop.f32.mrf.mxu0
  %v285 = vadd.f32 0.0, %v284
  %v286 = vpop.f32.mrf.mxu0
  %287 = vdwg.mxu0
  %v288 = vld [vmem:[%s4] sm:$0xff]
  %v289 = vld [vmem:[%s4 + $0x8] sm:$0xff]
  %v290 = vld [vmem:[%s4 + $0x10] sm:$0xff]
  %v291 = vld [vmem:[%s4 + $0x18] sm:$0xff]
  %v292 = vld [vmem:[%s4 + $0x20] sm:$0xff]
  %v293 = vld [vmem:[%s4 + $0x28] sm:$0xff]
  %v294 = vld [vmem:[%s4 + $0x30] sm:$0xff]
  %v295 = vld [vmem:[%s4 + $0x38] sm:$0xff]
  %v296 = vld [vmem:[%s4 + $0x40] sm:$0xff]
  %v297 = vld [vmem:[%s4 + $0x48] sm:$0xff]
  %v298 = vld [vmem:[%s4 + $0x50] sm:$0xff]
  %v299 = vld [vmem:[%s4 + $0x58] sm:$0xff]
  %v300 = vld [vmem:[%s5] sm:$0xff]
  %v301 = vld [vmem:[%s5 + $0x8] sm:$0xff]
  %v302 = vld [vmem:[%s5 + $0x10] sm:$0xff]
  %v303 = vld [vmem:[%s5 + $0x18] sm:$0xff]
  %v304 = vld [vmem:[%s5 + $0x20] sm:$0xff]
  %v305 = vld [vmem:[%s5 + $0x28] sm:$0xff]
  %v306 = vld [vmem:[%s5 + $0x30] sm:$0xff]
  %v307 = vld [vmem:[%s5 + $0x38] sm:$0xff]
  %v308 = vld [vmem:[%s5 + $0x40] sm:$0xff]
  %v309 = vld [vmem:[%s5 + $0x48] sm:$0xff]
  %v310 = vld [vmem:[%s5 + $0x50] sm:$0xff]
  %v311 = vld [vmem:[%s5 + $0x58] sm:$0xff]
  %vm312 = vcmask 261120
  %v314 = vsel %vm312, %v280, 0
  %v317 = vsel %vm312, %v285, 0
  %319 = vmatprep.subr.mxu0 0.0
  %320 = vmatpush1.msra.mxu0 0.0
  %321 = vmatprep.subr.mxu0 0.0
  %322 = vmatpush1.msra.mxu0 0.0
  %323 = vmatprep.subr.mxu0 0.0
  %324 = vmatpush1.msra.mxu0 0.0
  %325 = vmatprep.subr.mxu0 0.0
  %326 = vmatpush1.msra.mxu0 0.0
  %327 = vmatprep.subr.mxu0 0.0
  %328 = vmatpush1.msra.mxu0 0.0
  %329 = vmatprep.subr.mxu0 0.0
  %330 = vmatpush1.msra.mxu0 0.0
  %331 = vmatprep.subr.mxu0 0.0
  %332 = vmatpush1.msra.mxu0 0.0
  %333 = vmatprep.subr.mxu0 0.0
  %334 = vmatpush1.msra.mxu0 0.0
  %335 = vmatprep.subr.mxu0 0.0
  %336 = vmatpush1.msra.mxu0 0.0
  %337 = vmatprep.subr.mxu0 0.0
  %338 = vmatpush1.msra.mxu0 0.0
  %339 = vmatprep.subr.mxu0 0.0
  %340 = vmatpush1.msra.mxu0 0.0
  %341 = vmatprep.subr.mxu0 0.0
  %342 = vmatpush1.msra.mxu0 0.0
  %343 = vmatprep.subr.mxu0 %v310
  %344 = vmatpush1.msra.mxu0 %v309
  %345 = vmatprep.subr.mxu0 %v307
  %346 = vmatpush1.msra.mxu0 %v306
  %347 = vmatprep.subr.mxu0 %v304
  %348 = vmatpush1.msra.mxu0 %v303
  %349 = vmatprep.subr.mxu0 %v301
  %350 = vmatpush1.msra.mxu0 %v300
  %351 = vmatprep.subr.mxu0 0.0
  %352 = vmatpush2.msra.mxu0 0.0
  %353 = vmatprep.subr.mxu0 0.0
  %354 = vmatpush2.msra.mxu0 0.0
  %355 = vmatprep.subr.mxu0 0.0
  %356 = vmatpush2.msra.mxu0 0.0
  %357 = vmatprep.subr.mxu0 0.0
  %358 = vmatpush2.msra.mxu0 0.0
  %359 = vmatprep.subr.mxu0 0.0
  %360 = vmatpush2.msra.mxu0 0.0
  %361 = vmatprep.subr.mxu0 0.0
  %362 = vmatpush2.msra.mxu0 0.0
  %363 = vmatprep.subr.mxu0 0.0
  %364 = vmatpush2.msra.mxu0 0.0
  %365 = vmatprep.subr.mxu0 0.0
  %366 = vmatpush2.msra.mxu0 0.0
  %367 = vmatprep.subr.mxu0 0.0
  %368 = vmatpush2.msra.mxu0 0.0
  %369 = vmatprep.subr.mxu0 0.0
  %370 = vmatpush2.msra.mxu0 0.0
  %371 = vmatprep.subr.mxu0 0.0
  %372 = vmatpush2.msra.mxu0 0.0
  %373 = vmatprep.subr.mxu0 0.0
  %374 = vmatpush2.msra.mxu0 0.0
  %375 = vmatprep.subr.mxu0 0.0
  %376 = vmatpush2.msra.mxu0 0.0
  %377 = vmatprep.subr.mxu0 0.0
  %378 = vmatpush2.msra.mxu0 0.0
  %379 = vmatprep.subr.mxu0 0.0
  %380 = vmatpush2.msra.mxu0 0.0
  %381 = vmatprep.subr.mxu0 0.0
  %382 = vmatpush2.msra.mxu0 0.0
  %383 = vmatprep.mubr.f32.mxu0 0.0
  %384 = vmatmul.mubr.f32.gmra.mxu0 %v314
  %v385 = vpop.f32.mrf.mxu0
  %v386 = vadd.f32 0.0, %v385
  %v387 = vpop.f32.mrf.mxu0
  %v388 = vadd.f32 0.0, %v387
  %389 = vmatprep.mubr.f32.mxu0 0.0
  %390 = vmatmul.mubr.f32.gmra.mxu0 %v317
  %v391 = vpop.f32.mrf.mxu0
  %v392 = vadd.f32 0.0, %v391
  %v393 = vpop.f32.mrf.mxu0
  %v394 = vadd.f32 0.0, %v393
  %395 = vdwg.mxu0
  %396 = vmatprep.subr.mxu0 0.0
  %397 = vmatpush1.msra.mxu0 0.0
  %398 = vmatprep.subr.mxu0 0.0
  %399 = vmatpush1.msra.mxu0 0.0
  %400 = vmatprep.subr.mxu0 0.0
  %401 = vmatpush1.msra.mxu0 0.0
  %402 = vmatprep.subr.mxu0 0.0
  %403 = vmatpush1.msra.mxu0 0.0
  %404 = vmatprep.subr.mxu0 0.0
  %405 = vmatpush1.msra.mxu0 0.0
  %406 = vmatprep.subr.mxu0 0.0
  %407 = vmatpush1.msra.mxu0 0.0
  %408 = vmatprep.subr.mxu0 0.0
  %409 = vmatpush1.msra.mxu0 0.0
  %410 = vmatprep.subr.mxu0 0.0
  %411 = vmatpush1.msra.mxu0 0.0
  %412 = vmatprep.subr.mxu0 0.0
  %413 = vmatpush1.msra.mxu0 0.0
  %414 = vmatprep.subr.mxu0 0.0
  %415 = vmatpush1.msra.mxu0 0.0
  %416 = vmatprep.subr.mxu0 0.0
  %417 = vmatpush1.msra.mxu0 0.0
  %418 = vmatprep.subr.mxu0 0.0
  %419 = vmatpush1.msra.mxu0 0.0
  %420 = vmatprep.subr.mxu0 0.0
  %421 = vmatpush1.msra.mxu0 %v311
  %422 = vmatprep.subr.mxu0 0.0
  %423 = vmatpush1.msra.mxu0 %v308
  %424 = vmatprep.subr.mxu0 0.0
  %425 = vmatpush1.msra.mxu0 %v305
  %426 = vmatprep.subr.mxu0 0.0
  %427 = vmatpush1.msra.mxu0 %v302
  %428 = vmatprep.subr.mxu0 0.0
  %429 = vmatpush2.msra.mxu0 0.0
  %430 = vmatprep.subr.mxu0 0.0
  %431 = vmatpush2.msra.mxu0 0.0
  %432 = vmatprep.subr.mxu0 0.0
  %433 = vmatpush2.msra.mxu0 0.0
  %434 = vmatprep.subr.mxu0 0.0
  %435 = vmatpush2.msra.mxu0 0.0
  %436 = vmatprep.subr.mxu0 0.0
  %437 = vmatpush2.msra.mxu0 0.0
  %438 = vmatprep.subr.mxu0 0.0
  %439 = vmatpush2.msra.mxu0 0.0
  %440 = vmatprep.subr.mxu0 0.0
  %441 = vmatpush2.msra.mxu0 0.0
  %442 = vmatprep.subr.mxu0 0.0
  %443 = vmatpush2.msra.mxu0 0.0
  %444 = vmatprep.subr.mxu0 0.0
  %445 = vmatpush2.msra.mxu0 0.0
  %446 = vmatprep.subr.mxu0 0.0
  %447 = vmatpush2.msra.mxu0 0.0
  %448 = vmatprep.subr.mxu0 0.0
  %449 = vmatpush2.msra.mxu0 0.0
  %450 = vmatprep.subr.mxu0 0.0
  %451 = vmatpush2.msra.mxu0 0.0
  %452 = vmatprep.subr.mxu0 0.0
  %453 = vmatpush2.msra.mxu0 0.0
  %454 = vmatprep.subr.mxu0 0.0
  %455 = vmatpush2.msra.mxu0 0.0
  %456 = vmatprep.subr.mxu0 0.0
  %457 = vmatpush2.msra.mxu0 0.0
  %458 = vmatprep.subr.mxu0 0.0
  %459 = vmatpush2.msra.mxu0 0.0
  %460 = vmatprep.mubr.f32.mxu0 0.0
  %461 = vmatmul.mubr.f32.gmra.mxu0 %v314
  %v462 = vpop.f32.mrf.mxu0
  %v463 = vadd.f32 0.0, %v462
  %v464 = vpop.f32.mrf.mxu0
  %465 = vmatprep.mubr.f32.mxu0 0.0
  %466 = vmatmul.mubr.f32.gmra.mxu0 %v317
  %v467 = vpop.f32.mrf.mxu0
  %v468 = vadd.f32 0.0, %v467
  %v469 = vpop.f32.mrf.mxu0
  %470 = vdwg.mxu0
  %v472 = vsel %vm312, %v192, 0
  %v475 = vsel %vm312, %v197, 0
  %477 = vmatprep.subr.mxu0 0.0
  %478 = vmatpush1.msra.mxu0 0.0
  %479 = vmatprep.subr.mxu0 0.0
  %480 = vmatpush1.msra.mxu0 0.0
  %481 = vmatprep.subr.mxu0 0.0
  %482 = vmatpush1.msra.mxu0 0.0
  %483 = vmatprep.subr.mxu0 0.0
  %484 = vmatpush1.msra.mxu0 0.0
  %485 = vmatprep.subr.mxu0 0.0
  %486 = vmatpush1.msra.mxu0 0.0
  %487 = vmatprep.subr.mxu0 0.0
  %488 = vmatpush1.msra.mxu0 0.0
  %489 = vmatprep.subr.mxu0 0.0
  %490 = vmatpush1.msra.mxu0 0.0
  %491 = vmatprep.subr.mxu0 0.0
  %492 = vmatpush1.msra.mxu0 0.0
  %493 = vmatprep.subr.mxu0 0.0
  %494 = vmatpush1.msra.mxu0 0.0
  %495 = vmatprep.subr.mxu0 0.0
  %496 = vmatpush1.msra.mxu0 0.0
  %497 = vmatprep.subr.mxu0 0.0
  %498 = vmatpush1.msra.mxu0 0.0
  %499 = vmatprep.subr.mxu0 0.0
  %500 = vmatpush1.msra.mxu0 0.0
  %501 = vmatprep.subr.mxu0 %v298
  %502 = vmatpush1.msra.mxu0 %v297
  %503 = vmatprep.subr.mxu0 %v295
  %504 = vmatpush1.msra.mxu0 %v294
  %505 = vmatprep.subr.mxu0 %v292
  %506 = vmatpush1.msra.mxu0 %v291
  %507 = vmatprep.subr.mxu0 %v289
  %508 = vmatpush1.msra.mxu0 %v288
  %509 = vmatprep.subr.mxu0 0.0
  %510 = vmatpush2.msra.mxu0 0.0
  %511 = vmatprep.subr.mxu0 0.0
  %512 = vmatpush2.msra.mxu0 0.0
  %513 = vmatprep.subr.mxu0 0.0
  %514 = vmatpush2.msra.mxu0 0.0
  %515 = vmatprep.subr.mxu0 0.0
  %516 = vmatpush2.msra.mxu0 0.0
  %517 = vmatprep.subr.mxu0 0.0
  %518 = vmatpush2.msra.mxu0 0.0
  %519 = vmatprep.subr.mxu0 0.0
  %520 = vmatpush2.msra.mxu0 0.0
  %521 = vmatprep.subr.mxu0 0.0
  %522 = vmatpush2.msra.mxu0 0.0
  %523 = vmatprep.subr.mxu0 0.0
  %524 = vmatpush2.msra.mxu0 0.0
  %525 = vmatprep.subr.mxu0 0.0
  %526 = vmatpush2.msra.mxu0 0.0
  %527 = vmatprep.subr.mxu0 0.0
  %528 = vmatpush2.msra.mxu0 0.0
  %529 = vmatprep.subr.mxu0 0.0
  %530 = vmatpush2.msra.mxu0 0.0
  %531 = vmatprep.subr.mxu0 0.0
  %532 = vmatpush2.msra.mxu0 0.0
  %533 = vmatprep.subr.mxu0 0.0
  %534 = vmatpush2.msra.mxu0 0.0
  %535 = vmatprep.subr.mxu0 0.0
  %536 = vmatpush2.msra.mxu0 0.0
  %537 = vmatprep.subr.mxu0 0.0
  %538 = vmatpush2.msra.mxu0 0.0
  %539 = vmatprep.subr.mxu0 0.0
  %540 = vmatpush2.msra.mxu0 0.0
  %541 = vmatprep.mubr.f32.mxu0 0.0
  %542 = vmatmul.mubr.f32.gmra.mxu0 %v472
  %v543 = vpop.f32.mrf.mxu0
  %v544 = vadd.f32 %v386, %v543
  %v545 = vpop.f32.mrf.mxu0
  %v546 = vadd.f32 %v388, %v545
  %547 = vmatprep.mubr.f32.mxu0 0.0
  %548 = vmatmul.mubr.f32.gmra.mxu0 %v475
  %v549 = vpop.f32.mrf.mxu0
  %v550 = vadd.f32 %v392, %v549
  %v551 = vpop.f32.mrf.mxu0
  %v552 = vadd.f32 %v394, %v551
  %553 = vdwg.mxu0
  %554 = vmatprep.subr.mxu0 0.0
  %555 = vmatpush1.msra.mxu0 0.0
  %556 = vmatprep.subr.mxu0 0.0
  %557 = vmatpush1.msra.mxu0 0.0
  %558 = vmatprep.subr.mxu0 0.0
  %559 = vmatpush1.msra.mxu0 0.0
  %560 = vmatprep.subr.mxu0 0.0
  %561 = vmatpush1.msra.mxu0 0.0
  %562 = vmatprep.subr.mxu0 0.0
  %563 = vmatpush1.msra.mxu0 0.0
  %564 = vmatprep.subr.mxu0 0.0
  %565 = vmatpush1.msra.mxu0 0.0
  %566 = vmatprep.subr.mxu0 0.0
  %567 = vmatpush1.msra.mxu0 0.0
  %568 = vmatprep.subr.mxu0 0.0
  %569 = vmatpush1.msra.mxu0 0.0
  %570 = vmatprep.subr.mxu0 0.0
  %571 = vmatpush1.msra.mxu0 0.0
  %572 = vmatprep.subr.mxu0 0.0
  %573 = vmatpush1.msra.mxu0 0.0
  %574 = vmatprep.subr.mxu0 0.0
  %575 = vmatpush1.msra.mxu0 0.0
  %576 = vmatprep.subr.mxu0 0.0
  %577 = vmatpush1.msra.mxu0 0.0
  %578 = vmatprep.subr.mxu0 0.0
  %579 = vmatpush1.msra.mxu0 %v299
  %580 = vmatprep.subr.mxu0 0.0
  %581 = vmatpush1.msra.mxu0 %v296
  %582 = vmatprep.subr.mxu0 0.0
  %583 = vmatpush1.msra.mxu0 %v293
  %584 = vmatprep.subr.mxu0 0.0
  %585 = vmatpush1.msra.mxu0 %v290
  %586 = vmatprep.subr.mxu0 0.0
  %587 = vmatpush2.msra.mxu0 0.0
  %588 = vmatprep.subr.mxu0 0.0
  %589 = vmatpush2.msra.mxu0 0.0
  %590 = vmatprep.subr.mxu0 0.0
  %591 = vmatpush2.msra.mxu0 0.0
  %592 = vmatprep.subr.mxu0 0.0
  %593 = vmatpush2.msra.mxu0 0.0
  %594 = vmatprep.subr.mxu0 0.0
  %595 = vmatpush2.msra.mxu0 0.0
  %596 = vmatprep.subr.mxu0 0.0
  %597 = vmatpush2.msra.mxu0 0.0
  %598 = vmatprep.subr.mxu0 0.0
  %599 = vmatpush2.msra.mxu0 0.0
  %600 = vmatprep.subr.mxu0 0.0
  %601 = vmatpush2.msra.mxu0 0.0
  %602 = vmatprep.subr.mxu0 0.0
  %603 = vmatpush2.msra.mxu0 0.0
  %604 = vmatprep.subr.mxu0 0.0
  %605 = vmatpush2.msra.mxu0 0.0
  %606 = vmatprep.subr.mxu0 0.0
  %607 = vmatpush2.msra.mxu0 0.0
  %608 = vmatprep.subr.mxu0 0.0
  %609 = vmatpush2.msra.mxu0 0.0
  %610 = vmatprep.subr.mxu0 0.0
  %611 = vmatpush2.msra.mxu0 0.0
  %612 = vmatprep.subr.mxu0 0.0
  %613 = vmatpush2.msra.mxu0 0.0
  %614 = vmatprep.subr.mxu0 0.0
  %615 = vmatpush2.msra.mxu0 0.0
  %616 = vmatprep.subr.mxu0 0.0
  %617 = vmatpush2.msra.mxu0 0.0
  %618 = vmatprep.mubr.f32.mxu0 0.0
  %619 = vmatmul.mubr.f32.gmra.mxu0 %v472
  %v620 = vpop.f32.mrf.mxu0
  %v621 = vadd.f32 %v463, %v620
  %v622 = vpop.f32.mrf.mxu0
  %623 = vmatprep.mubr.f32.mxu0 0.0
  %624 = vmatmul.mubr.f32.gmra.mxu0 %v475
  %v625 = vpop.f32.mrf.mxu0
  %v626 = vadd.f32 %v468, %v625
  %v627 = vpop.f32.mrf.mxu0
  %628 = vdwg.mxu0
  %v629 = vld [vmem:[%s6] sm:$0x7]
  %v631 = vlaneseq
  %v632 = vshrl.u32 %v631, 7
  %v633 = vsub.s32 0, %v632
  %v634 = vrot.slane %v629, %v633
  %v635 = vlaneseq
  %v636 = vshrl.u32 %v635, 7
  %v637 = vsub.s32 1, %v636
  %v638 = vrot.slane %v629, %v637
  %v639 = vlaneseq
  %v640 = vshrl.u32 %v639, 7
  %v641 = vsub.s32 2, %v640
  %v642 = vrot.slane %v629, %v641
  %v646 = vadd.f32 %v544, %v634
  %v647 = vadd.f32 %v546, %v638
  %v648 = vadd.f32 %v621, %v642
  %v649 = vadd.f32 %v550, %v634
  %v650 = vadd.f32 %v552, %v638
  %v651 = vadd.f32 %v626, %v642
  %v652 = vmax.f32 %v646, 0.0
  %v653 = vmax.f32 %v647, 0.0
  %v654 = vmax.f32 %v648, 0.0
  %v655 = vmax.f32 %v649, 0.0
  %v656 = vmax.f32 %v650, 0.0
  %v657 = vmax.f32 %v651, 0.0
  %v658 = vld [vmem:[%s7] sm:$0xff]
  %v659 = vld [vmem:[%s7 + $0x8] sm:$0xff]
  %v660 = vld [vmem:[%s7 + $0x10] sm:$0xff]
  %v661 = vld [vmem:[%s7 + $0x18] sm:$0xff]
  %v662 = vld [vmem:[%s7 + $0x20] sm:$0xff]
  %v663 = vld [vmem:[%s7 + $0x28] sm:$0xff]
  %v664 = vld [vmem:[%s7 + $0x30] sm:$0xff]
  %v665 = vld [vmem:[%s7 + $0x38] sm:$0xff]
  %v666 = vld [vmem:[%s7 + $0x40] sm:$0xff]
  %v667 = vld [vmem:[%s7 + $0x48] sm:$0xff]
  %v668 = vld [vmem:[%s7 + $0x50] sm:$0xff]
  %v669 = vld [vmem:[%s7 + $0x58] sm:$0xff]
  %v670 = vld [vmem:[%s7 + $0x60] sm:$0xff]
  %v671 = vld [vmem:[%s7 + $0x68] sm:$0xff]
  %v672 = vld [vmem:[%s7 + $0x70] sm:$0xff]
  %v673 = vld [vmem:[%s7 + $0x78] sm:$0xff]
  %v674 = vld [vmem:[%s7 + $0x80] sm:$0xff]
  %v675 = vld [vmem:[%s7 + $0x88] sm:$0xff]
  %v676 = vld [vmem:[%s7 + $0x90] sm:$0xff]
  %v677 = vld [vmem:[%s7 + $0x98] sm:$0xff]
  %v678 = vld [vmem:[%s7 + $0xa0] sm:$0xff]
  %v679 = vld [vmem:[%s7 + $0xa8] sm:$0xff]
  %v680 = vld [vmem:[%s7 + $0xb0] sm:$0xff]
  %v681 = vld [vmem:[%s7 + $0xb8] sm:$0xff]
  %v682 = vld [vmem:[%s7 + $0xc0] sm:$0xff]
  %v683 = vld [vmem:[%s7 + $0xc8] sm:$0xff]
  %v684 = vld [vmem:[%s7 + $0xd0] sm:$0xff]
  %v685 = vld [vmem:[%s7 + $0xd8] sm:$0xff]
  %v686 = vld [vmem:[%s7 + $0xe0] sm:$0xff]
  %v687 = vld [vmem:[%s7 + $0xe8] sm:$0xff]
  %v688 = vld [vmem:[%s7 + $0xf0] sm:$0xff]
  %v689 = vld [vmem:[%s7 + $0xf8] sm:$0xff]
  %v690 = vld [vmem:[%s7 + $0x100] sm:$0xff]
  %v691 = vld [vmem:[%s7 + $0x108] sm:$0xff]
  %v692 = vld [vmem:[%s7 + $0x110] sm:$0xff]
  %v693 = vld [vmem:[%s7 + $0x118] sm:$0xff]
  %v694 = vld [vmem:[%s7 + $0x120] sm:$0xff]
  %v695 = vld [vmem:[%s7 + $0x128] sm:$0xff]
  %v696 = vld [vmem:[%s7 + $0x130] sm:$0xff]
  %v697 = vld [vmem:[%s7 + $0x138] sm:$0xff]
  %v698 = vld [vmem:[%s7 + $0x140] sm:$0xff]
  %v699 = vld [vmem:[%s7 + $0x148] sm:$0xff]
  %v700 = vld [vmem:[%s7 + $0x150] sm:$0xff]
  %v701 = vld [vmem:[%s7 + $0x158] sm:$0xff]
  %v702 = vld [vmem:[%s7 + $0x160] sm:$0xff]
  %v703 = vld [vmem:[%s7 + $0x168] sm:$0xff]
  %v704 = vld [vmem:[%s7 + $0x170] sm:$0xff]
  %v705 = vld [vmem:[%s7 + $0x178] sm:$0xff]
  %v706 = vld [vmem:[%s7 + $0x180] sm:$0xff]
  %v707 = vld [vmem:[%s7 + $0x188] sm:$0xff]
  %v708 = vld [vmem:[%s7 + $0x190] sm:$0xff]
  %v709 = vld [vmem:[%s7 + $0x198] sm:$0xff]
  %v710 = vld [vmem:[%s7 + $0x1a0] sm:$0xff]
  %v711 = vld [vmem:[%s7 + $0x1a8] sm:$0xff]
  %v712 = vld [vmem:[%s7 + $0x1b0] sm:$0xff]
  %v713 = vld [vmem:[%s7 + $0x1b8] sm:$0xff]
  %v714 = vld [vmem:[%s7 + $0x1c0] sm:$0xff]
  %v715 = vld [vmem:[%s7 + $0x1c8] sm:$0xff]
  %v716 = vld [vmem:[%s7 + $0x1d0] sm:$0xff]
  %v717 = vld [vmem:[%s7 + $0x1d8] sm:$0xff]
  %v718 = vld [vmem:[%s7 + $0x1e0] sm:$0xff]
  %v719 = vld [vmem:[%s7 + $0x1e8] sm:$0xff]
  %v720 = vld [vmem:[%s7 + $0x1f0] sm:$0xff]
  %v721 = vld [vmem:[%s7 + $0x1f8] sm:$0xff]
  %v722 = vld [vmem:[%s7 + $0x200] sm:$0xff]
  %v723 = vld [vmem:[%s7 + $0x208] sm:$0xff]
  %v724 = vld [vmem:[%s7 + $0x210] sm:$0xff]
  %v725 = vld [vmem:[%s7 + $0x218] sm:$0xff]
  %v726 = vld [vmem:[%s7 + $0x220] sm:$0xff]
  %v727 = vld [vmem:[%s7 + $0x228] sm:$0xff]
  %v728 = vld [vmem:[%s7 + $0x230] sm:$0xff]
  %v729 = vld [vmem:[%s7 + $0x238] sm:$0xff]
  %v730 = vld [vmem:[%s7 + $0x240] sm:$0xff]
  %v731 = vld [vmem:[%s7 + $0x248] sm:$0xff]
  %v732 = vld [vmem:[%s7 + $0x250] sm:$0xff]
  %v733 = vld [vmem:[%s7 + $0x258] sm:$0xff]
  %v734 = vld [vmem:[%s7 + $0x260] sm:$0xff]
  %v735 = vld [vmem:[%s7 + $0x268] sm:$0xff]
  %v736 = vld [vmem:[%s7 + $0x270] sm:$0xff]
  %v737 = vld [vmem:[%s7 + $0x278] sm:$0xff]
  %v738 = vld [vmem:[%s7 + $0x280] sm:$0xff]
  %v739 = vld [vmem:[%s7 + $0x288] sm:$0xff]
  %v740 = vld [vmem:[%s7 + $0x290] sm:$0xff]
  %v741 = vld [vmem:[%s7 + $0x298] sm:$0xff]
  %v742 = vld [vmem:[%s7 + $0x2a0] sm:$0xff]
  %v743 = vld [vmem:[%s7 + $0x2a8] sm:$0xff]
  %v744 = vld [vmem:[%s7 + $0x2b0] sm:$0xff]
  %v745 = vld [vmem:[%s7 + $0x2b8] sm:$0xff]
  %v746 = vld [vmem:[%s7 + $0x2c0] sm:$0xff]
  %v747 = vld [vmem:[%s7 + $0x2c8] sm:$0xff]
  %v748 = vld [vmem:[%s8] sm:$0x3]
  %v750 = vlaneseq
  %v751 = vshrl.u32 %v750, 7
  %v752 = vsub.s32 0, %v751
  %v753 = vrot.slane %v748, %v752
  %v754 = vlaneseq
  %v755 = vshrl.u32 %v754, 7
  %v756 = vsub.s32 1, %v755
  %v757 = vrot.slane %v748, %v756
  %vm760 = vcmask 850944
  %v762 = vsel %vm760, %v654, 0
  %v765 = vsel %vm760, %v657, 0
  %767 = vmatprep.subr.mxu0 %v689
  %768 = vmatpush1.msra.mxu0 %v688
  %769 = vmatprep.subr.mxu0 %v687
  %770 = vmatpush1.msra.mxu0 %v686
  %771 = vmatprep.subr.mxu0 %v685
  %772 = vmatpush1.msra.mxu0 %v684
  %773 = vmatprep.subr.mxu0 %v683
  %774 = vmatpush1.msra.mxu0 %v682
  %775 = vmatprep.subr.mxu0 %v681
  %776 = vmatpush1.msra.mxu0 %v680
  %777 = vmatprep.subr.mxu0 %v679
  %778 = vmatpush1.msra.mxu0 %v678
  %779 = vmatprep.subr.mxu0 %v677
  %780 = vmatpush1.msra.mxu0 %v676
  %781 = vmatprep.subr.mxu0 %v675
  %782 = vmatpush1.msra.mxu0 %v674
  %783 = vmatprep.subr.mxu0 %v673
  %784 = vmatpush1.msra.mxu0 %v672
  %785 = vmatprep.subr.mxu0 %v671
  %786 = vmatpush1.msra.mxu0 %v670
  %787 = vmatprep.subr.mxu0 %v669
  %788 = vmatpush1.msra.mxu0 %v668
  %789 = vmatprep.subr.mxu0 %v667
  %790 = vmatpush1.msra.mxu0 %v666
  %791 = vmatprep.subr.mxu0 %v665
  %792 = vmatpush1.msra.mxu0 %v664
  %793 = vmatprep.subr.mxu0 %v663
  %794 = vmatpush1.msra.mxu0 %v662
  %795 = vmatprep.subr.mxu0 %v661
  %796 = vmatpush1.msra.mxu0 %v660
  %797 = vmatprep.subr.mxu0 %v659
  %798 = vmatpush1.msra.mxu0 %v658
  %799 = vmatprep.subr.mxu0 %v721
  %800 = vmatpush2.msra.mxu0 %v720
  %801 = vmatprep.subr.mxu0 %v719
  %802 = vmatpush2.msra.mxu0 %v718
  %803 = vmatprep.subr.mxu0 %v717
  %804 = vmatpush2.msra.mxu0 %v716
  %805 = vmatprep.subr.mxu0 %v715
  %806 = vmatpush2.msra.mxu0 %v714
  %807 = vmatprep.subr.mxu0 %v713
  %808 = vmatpush2.msra.mxu0 %v712
  %809 = vmatprep.subr.mxu0 %v711
  %810 = vmatpush2.msra.mxu0 %v710
  %811 = vmatprep.subr.mxu0 %v709
  %812 = vmatpush2.msra.mxu0 %v708
  %813 = vmatprep.subr.mxu0 %v707
  %814 = vmatpush2.msra.mxu0 %v706
  %815 = vmatprep.subr.mxu0 %v705
  %816 = vmatpush2.msra.mxu0 %v704
  %817 = vmatprep.subr.mxu0 %v703
  %818 = vmatpush2.msra.mxu0 %v702
  %819 = vmatprep.subr.mxu0 %v701
  %820 = vmatpush2.msra.mxu0 %v700
  %821 = vmatprep.subr.mxu0 %v699
  %822 = vmatpush2.msra.mxu0 %v698
  %823 = vmatprep.subr.mxu0 %v697
  %824 = vmatpush2.msra.mxu0 %v696
  %825 = vmatprep.subr.mxu0 %v695
  %826 = vmatpush2.msra.mxu0 %v694
  %827 = vmatprep.subr.mxu0 %v693
  %828 = vmatpush2.msra.mxu0 %v692
  %829 = vmatprep.subr.mxu0 %v691
  %830 = vmatpush2.msra.mxu0 %v690
  %831 = vmatprep.mubr.f32.mxu0 %v653
  %832 = vmatmul.mubr.f32.gmra.mxu0 %v652
  %v833 = vpop.f32.mrf.mxu0
  %v834 = vadd.f32 %v753, %v833
  %v835 = vpop.f32.mrf.mxu0
  %v836 = vadd.f32 %v757, %v835
  %837 = vmatprep.mubr.f32.mxu0 %v656
  %838 = vmatmul.mubr.f32.gmra.mxu0 %v655
  %v839 = vpop.f32.mrf.mxu0
  %v840 = vadd.f32 %v753, %v839
  %v841 = vpop.f32.mrf.mxu0
  %v842 = vadd.f32 %v757, %v841
  %843 = vdwg.mxu0
  %844 = vmatprep.subr.mxu0 0.0
  %845 = vmatpush1.msra.mxu0 0.0
  %846 = vmatprep.subr.mxu0 0.0
  %847 = vmatpush1.msra.mxu0 0.0
  %848 = vmatprep.subr.mxu0 0.0
  %849 = vmatpush1.msra.mxu0 0.0
  %850 = vmatprep.subr.mxu0 %v747
  %851 = vmatpush1.msra.mxu0 %v746
  %852 = vmatprep.subr.mxu0 %v745
  %853 = vmatpush1.msra.mxu0 %v744
  %854 = vmatprep.subr.mxu0 %v743
  %855 = vmatpush1.msra.mxu0 %v742
  %856 = vmatprep.subr.mxu0 %v741
  %857 = vmatpush1.msra.mxu0 %v740
  %858 = vmatprep.subr.mxu0 %v739
  %859 = vmatpush1.msra.mxu0 %v738
  %860 = vmatprep.subr.mxu0 %v737
  %861 = vmatpush1.msra.mxu0 %v736
  %862 = vmatprep.subr.mxu0 %v735
  %863 = vmatpush1.msra.mxu0 %v734
  %864 = vmatprep.subr.mxu0 %v733
  %865 = vmatpush1.msra.mxu0 %v732
  %866 = vmatprep.subr.mxu0 %v731
  %867 = vmatpush1.msra.mxu0 %v730
  %868 = vmatprep.subr.mxu0 %v729
  %869 = vmatpush1.msra.mxu0 %v728
  %870 = vmatprep.subr.mxu0 %v727
  %871 = vmatpush1.msra.mxu0 %v726
  %872 = vmatprep.subr.mxu0 %v725
  %873 = vmatpush1.msra.mxu0 %v724
  %874 = vmatprep.subr.mxu0 %v723
  %875 = vmatpush1.msra.mxu0 %v722
  %876 = vmatprep.subr.mxu0 0.0
  %877 = vmatpush2.msra.mxu0 0.0
  %878 = vmatprep.subr.mxu0 0.0
  %879 = vmatpush2.msra.mxu0 0.0
  %880 = vmatprep.subr.mxu0 0.0
  %881 = vmatpush2.msra.mxu0 0.0
  %882 = vmatprep.subr.mxu0 0.0
  %883 = vmatpush2.msra.mxu0 0.0
  %884 = vmatprep.subr.mxu0 0.0
  %885 = vmatpush2.msra.mxu0 0.0
  %886 = vmatprep.subr.mxu0 0.0
  %887 = vmatpush2.msra.mxu0 0.0
  %888 = vmatprep.subr.mxu0 0.0
  %889 = vmatpush2.msra.mxu0 0.0
  %890 = vmatprep.subr.mxu0 0.0
  %891 = vmatpush2.msra.mxu0 0.0
  %892 = vmatprep.subr.mxu0 0.0
  %893 = vmatpush2.msra.mxu0 0.0
  %894 = vmatprep.subr.mxu0 0.0
  %895 = vmatpush2.msra.mxu0 0.0
  %896 = vmatprep.subr.mxu0 0.0
  %897 = vmatpush2.msra.mxu0 0.0
  %898 = vmatprep.subr.mxu0 0.0
  %899 = vmatpush2.msra.mxu0 0.0
  %900 = vmatprep.subr.mxu0 0.0
  %901 = vmatpush2.msra.mxu0 0.0
  %902 = vmatprep.subr.mxu0 0.0
  %903 = vmatpush2.msra.mxu0 0.0
  %904 = vmatprep.subr.mxu0 0.0
  %905 = vmatpush2.msra.mxu0 0.0
  %906 = vmatprep.subr.mxu0 0.0
  %907 = vmatpush2.msra.mxu0 0.0
  %908 = vmatprep.mubr.f32.mxu0 0.0
  %909 = vmatmul.mubr.f32.gmra.mxu0 %v762
  %v910 = vpop.f32.mrf.mxu0
  %v911 = vadd.f32 %v834, %v910
  %v912 = vpop.f32.mrf.mxu0
  %v913 = vadd.f32 %v836, %v912
  %914 = vmatprep.mubr.f32.mxu0 0.0
  %915 = vmatmul.mubr.f32.gmra.mxu0 %v765
  %v916 = vpop.f32.mrf.mxu0
  %v917 = vadd.f32 %v840, %v916
  %v918 = vpop.f32.mrf.mxu0
  %v919 = vadd.f32 %v842, %v918
  %920 = vdwg.mxu0
  %v921 = vmax.f32 %v911, 0.0
  %v922 = vmax.f32 %v913, 0.0
  %v923 = vmax.f32 %v917, 0.0
  %v924 = vmax.f32 %v919, 0.0
  %v925 = vld [vmem:[%s9] sm:$0xff]
  %v926 = vld [vmem:[%s9 + $0x8] sm:$0xff]
  %v927 = vld [vmem:[%s9 + $0x10] sm:$0xff]
  %v928 = vld [vmem:[%s9 + $0x18] sm:$0xff]
  %v929 = vld [vmem:[%s9 + $0x20] sm:$0xff]
  %v930 = vld [vmem:[%s9 + $0x28] sm:$0xff]
  %v931 = vld [vmem:[%s9 + $0x30] sm:$0xff]
  %v932 = vld [vmem:[%s9 + $0x38] sm:$0xff]
  %v933 = vld [vmem:[%s9 + $0x40] sm:$0xff]
  %v934 = vld [vmem:[%s9 + $0x48] sm:$0xff]
  %v935 = vld [vmem:[%s9 + $0x50] sm:$0xff]
  %v936 = vld [vmem:[%s9 + $0x58] sm:$0xff]
  %v937 = vld [vmem:[%s9 + $0x60] sm:$0xff]
  %v938 = vld [vmem:[%s9 + $0x68] sm:$0xff]
  %v939 = vld [vmem:[%s9 + $0x70] sm:$0xff]
  %v940 = vld [vmem:[%s9 + $0x78] sm:$0xff]
  %v941 = vld [vmem:[%s9 + $0x80] sm:$0xff]
  %v942 = vld [vmem:[%s9 + $0x88] sm:$0xff]
  %v943 = vld [vmem:[%s9 + $0x90] sm:$0xff]
  %v944 = vld [vmem:[%s9 + $0x98] sm:$0xff]
  %v945 = vld [vmem:[%s9 + $0xa0] sm:$0xff]
  %v946 = vld [vmem:[%s9 + $0xa8] sm:$0xff]
  %v947 = vld [vmem:[%s9 + $0xb0] sm:$0xff]
  %v948 = vld [vmem:[%s9 + $0xb8] sm:$0xff]
  %v949 = vld [vmem:[%s9 + $0xc0] sm:$0xff]
  %v950 = vld [vmem:[%s10] sm:$0x1]
  %v952 = vlaneseq
  %v953 = vshrl.u32 %v952, 7
  %v954 = vsub.s32 0, %v953
  %v955 = vrot.slane %v950, %v954
  %vm957 = vcmask 588800
  %v959 = vsel %vm957, %v922, 0
  %v962 = vsel %vm957, %v924, 0
  %964 = vmatprep.subr.mxu0 0.0
  %965 = vmatpush1.msra.mxu0 %v940
  %966 = vmatprep.subr.mxu0 0.0
  %967 = vmatpush1.msra.mxu0 %v939
  %968 = vmatprep.subr.mxu0 0.0
  %969 = vmatpush1.msra.mxu0 %v938
  %970 = vmatprep.subr.mxu0 0.0
  %971 = vmatpush1.msra.mxu0 %v937
  %972 = vmatprep.subr.mxu0 0.0
  %973 = vmatpush1.msra.mxu0 %v936
  %974 = vmatprep.subr.mxu0 0.0
  %975 = vmatpush1.msra.mxu0 %v935
  %976 = vmatprep.subr.mxu0 0.0
  %977 = vmatpush1.msra.mxu0 %v934
  %978 = vmatprep.subr.mxu0 0.0
  %979 = vmatpush1.msra.mxu0 %v933
  %980 = vmatprep.subr.mxu0 0.0
  %981 = vmatpush1.msra.mxu0 %v932
  %982 = vmatprep.subr.mxu0 0.0
  %983 = vmatpush1.msra.mxu0 %v931
  %984 = vmatprep.subr.mxu0 0.0
  %985 = vmatpush1.msra.mxu0 %v930
  %986 = vmatprep.subr.mxu0 0.0
  %987 = vmatpush1.msra.mxu0 %v929
  %988 = vmatprep.subr.mxu0 0.0
  %989 = vmatpush1.msra.mxu0 %v928
  %990 = vmatprep.subr.mxu0 0.0
  %991 = vmatpush1.msra.mxu0 %v927
  %992 = vmatprep.subr.mxu0 0.0
  %993 = vmatpush1.msra.mxu0 %v926
  %994 = vmatprep.subr.mxu0 0.0
  %995 = vmatpush1.msra.mxu0 %v925
  %996 = vmatprep.subr.mxu0 0.0
  %997 = vmatpush2.msra.mxu0 0.0
  %998 = vmatprep.subr.mxu0 0.0
  %999 = vmatpush2.msra.mxu0 0.0
  %1000 = vmatprep.subr.mxu0 0.0
  %1001 = vmatpush2.msra.mxu0 0.0
  %1002 = vmatprep.subr.mxu0 0.0
  %1003 = vmatpush2.msra.mxu0 0.0
  %1004 = vmatprep.subr.mxu0 0.0
  %1005 = vmatpush2.msra.mxu0 0.0
  %1006 = vmatprep.subr.mxu0 0.0
  %1007 = vmatpush2.msra.mxu0 0.0
  %1008 = vmatprep.subr.mxu0 0.0
  %1009 = vmatpush2.msra.mxu0 0.0
  %1010 = vmatprep.subr.mxu0 0.0
  %1011 = vmatpush2.msra.mxu0 %v949
  %1012 = vmatprep.subr.mxu0 0.0
  %1013 = vmatpush2.msra.mxu0 %v948
  %1014 = vmatprep.subr.mxu0 0.0
  %1015 = vmatpush2.msra.mxu0 %v947
  %1016 = vmatprep.subr.mxu0 0.0
  %1017 = vmatpush2.msra.mxu0 %v946
  %1018 = vmatprep.subr.mxu0 0.0
  %1019 = vmatpush2.msra.mxu0 %v945
  %1020 = vmatprep.subr.mxu0 0.0
  %1021 = vmatpush2.msra.mxu0 %v944
  %1022 = vmatprep.subr.mxu0 0.0
  %1023 = vmatpush2.msra.mxu0 %v943
  %1024 = vmatprep.subr.mxu0 0.0
  %1025 = vmatpush2.msra.mxu0 %v942
  %1026 = vmatprep.subr.mxu0 0.0
  %1027 = vmatpush2.msra.mxu0 %v941
  %1028 = vmatprep.mubr.f32.mxu0 %v959
  %1029 = vmatmul.mubr.f32.gmra.mxu0 %v921
  %v1030 = vpop.f32.mrf.mxu0
  %v1031 = vadd.f32 %v955, %v1030
  %v1032 = vpop.f32.mrf.mxu0
  %1033 = vmatprep.mubr.f32.mxu0 %v962
  %1034 = vmatmul.mubr.f32.gmra.mxu0 %v923
  %v1035 = vpop.f32.mrf.mxu0
  %v1036 = vadd.f32 %v955, %v1035
  %v1037 = vpop.f32.mrf.mxu0
  %1038 = vdwg.mxu0
  %v1039 = vmax.f32 %v1031, 0.0
  %v1040 = vmax.f32 %v1036, 0.0
  %v1041 = vld [vmem:[%s11] sm:$0xff]
  %v1042 = vld [vmem:[%s11 + $0x8] sm:$0xff]
  %v1043 = vld [vmem:[%s11 + $0x10] sm:$0xff]
  %v1044 = vld [vmem:[%s11 + $0x18] sm:$0xff]
  %v1045 = vld [vmem:[%s11 + $0x20] sm:$0xff]
  %v1046 = vld [vmem:[%s11 + $0x28] sm:$0xff]
  %v1047 = vld [vmem:[%s11 + $0x30] sm:$0xff]
  %v1048 = vld [vmem:[%s11 + $0x38] sm:$0xff]
  %v1049 = vld [vmem:[%s11 + $0x40] sm:$0xff]
  %v1050 = vld [vmem:[%s11 + $0x48] sm:$0xff]
  %v1051 = vld [vmem:[%s12] sm:$0x1]
  %v1053 = vlaneseq
  %v1054 = vshrl.u32 %v1053, 7
  %v1055 = vsub.s32 0, %v1054
  %v1056 = vrot.slane %v1051, %v1055
  %vm1058 = vcmask 654336
  %v1060 = vsel %vm1058, %v1039, 0
  %v1063 = vsel %vm1058, %v1040, 0
  %1065 = vmatprep.subr.mxu0 0.0
  %1066 = vmatpush1.msra.mxu0 0.0
  %1067 = vmatprep.subr.mxu0 0.0
  %1068 = vmatpush1.msra.mxu0 0.0
  %1069 = vmatprep.subr.mxu0 0.0
  %1070 = vmatpush1.msra.mxu0 0.0
  %1071 = vmatprep.subr.mxu0 0.0
  %1072 = vmatpush1.msra.mxu0 0.0
  %1073 = vmatprep.subr.mxu0 0.0
  %1074 = vmatpush1.msra.mxu0 0.0
  %1075 = vmatprep.subr.mxu0 0.0
  %1076 = vmatpush1.msra.mxu0 0.0
  %1077 = vmatprep.subr.mxu0 0.0
  %1078 = vmatpush1.msra.mxu0 %v1050
  %1079 = vmatprep.subr.mxu0 0.0
  %1080 = vmatpush1.msra.mxu0 %v1049
  %1081 = vmatprep.subr.mxu0 0.0
  %1082 = vmatpush1.msra.mxu0 %v1048
  %1083 = vmatprep.subr.mxu0 0.0
  %1084 = vmatpush1.msra.mxu0 %v1047
  %1085 = vmatprep.subr.mxu0 0.0
  %1086 = vmatpush1.msra.mxu0 %v1046
  %1087 = vmatprep.subr.mxu0 0.0
  %1088 = vmatpush1.msra.mxu0 %v1045
  %1089 = vmatprep.subr.mxu0 0.0
  %1090 = vmatpush1.msra.mxu0 %v1044
  %1091 = vmatprep.subr.mxu0 0.0
  %1092 = vmatpush1.msra.mxu0 %v1043
  %1093 = vmatprep.subr.mxu0 0.0
  %1094 = vmatpush1.msra.mxu0 %v1042
  %1095 = vmatprep.subr.mxu0 0.0
  %1096 = vmatpush1.msra.mxu0 %v1041
  %1097 = vmatprep.subr.mxu0 0.0
  %1098 = vmatpush2.msra.mxu0 0.0
  %1099 = vmatprep.subr.mxu0 0.0
  %1100 = vmatpush2.msra.mxu0 0.0
  %1101 = vmatprep.subr.mxu0 0.0
  %1102 = vmatpush2.msra.mxu0 0.0
  %1103 = vmatprep.subr.mxu0 0.0
  %1104 = vmatpush2.msra.mxu0 0.0
  %1105 = vmatprep.subr.mxu0 0.0
  %1106 = vmatpush2.msra.mxu0 0.0
  %1107 = vmatprep.subr.mxu0 0.0
  %1108 = vmatpush2.msra.mxu0 0.0
  %1109 = vmatprep.subr.mxu0 0.0
  %1110 = vmatpush2.msra.mxu0 0.0
  %1111 = vmatprep.subr.mxu0 0.0
  %1112 = vmatpush2.msra.mxu0 0.0
  %1113 = vmatprep.subr.mxu0 0.0
  %1114 = vmatpush2.msra.mxu0 0.0
  %1115 = vmatprep.subr.mxu0 0.0
  %1116 = vmatpush2.msra.mxu0 0.0
  %1117 = vmatprep.subr.mxu0 0.0
  %1118 = vmatpush2.msra.mxu0 0.0
  %1119 = vmatprep.subr.mxu0 0.0
  %1120 = vmatpush2.msra.mxu0 0.0
  %1121 = vmatprep.subr.mxu0 0.0
  %1122 = vmatpush2.msra.mxu0 0.0
  %1123 = vmatprep.subr.mxu0 0.0
  %1124 = vmatpush2.msra.mxu0 0.0
  %1125 = vmatprep.subr.mxu0 0.0
  %1126 = vmatpush2.msra.mxu0 0.0
  %1127 = vmatprep.subr.mxu0 0.0
  %1128 = vmatpush2.msra.mxu0 0.0
  %1129 = vmatprep.mubr.f32.mxu0 0.0
  %1130 = vmatmul.mubr.f32.gmra.mxu0 %v1060
  %v1131 = vpop.f32.mrf.mxu0
  %v1132 = vadd.f32 %v1056, %v1131
  %v1133 = vpop.f32.mrf.mxu0
  %1134 = vmatprep.mubr.f32.mxu0 0.0
  %1135 = vmatmul.mubr.f32.gmra.mxu0 %v1063
  %v1136 = vpop.f32.mrf.mxu0
  %v1137 = vadd.f32 %v1056, %v1136
  %v1138 = vpop.f32.mrf.mxu0
  %1139 = vdwg.mxu0
  %v1140 = vmax.f32 %v1132, 0.0
  %v1141 = vmax.f32 %v1137, 0.0
  %v1142 = vld [vmem:[%s13] sm:$0x3]
  %v1143 = vld [vmem:[#allocation2] sm:$0x1]
  %v1145 = vlaneseq
  %v1146 = vshrl.u32 %v1145, 7
  %v1147 = vsub.s32 0, %v1146
  %v1148 = vrot.slane %v1143, %v1147
  %vm1150 = vcmask 15360
  %v1152 = vsel %vm1150, %v1140, 0
  %v1155 = vsel %vm1150, %v1141, 0
  %v1158 = vsel %vm209, %v1142, 0
  %1160 = vmatprep.subr.mxu0 0.0
  %1161 = vmatpush1.msra.mxu0 0.0
  %1162 = vmatprep.subr.mxu0 0.0
  %1163 = vmatpush1.msra.mxu0 0.0
  %1164 = vmatprep.subr.mxu0 0.0
  %1165 = vmatpush1.msra.mxu0 0.0
  %1166 = vmatprep.subr.mxu0 0.0
  %1167 = vmatpush1.msra.mxu0 0.0
  %1168 = vmatprep.subr.mxu0 0.0
  %1169 = vmatpush1.msra.mxu0 0.0
  %1170 = vmatprep.subr.mxu0 0.0
  %1171 = vmatpush1.msra.mxu0 0.0
  %1172 = vmatprep.subr.mxu0 0.0
  %1173 = vmatpush1.msra.mxu0 0.0
  %1174 = vmatprep.subr.mxu0 0.0
  %1175 = vmatpush1.msra.mxu0 0.0
  %1176 = vmatprep.subr.mxu0 0.0
  %1177 = vmatpush1.msra.mxu0 0.0
  %1178 = vmatprep.subr.mxu0 0.0
  %1179 = vmatpush1.msra.mxu0 0.0
  %1180 = vmatprep.subr.mxu0 0.0
  %1181 = vmatpush1.msra.mxu0 0.0
  %1182 = vmatprep.subr.mxu0 0.0
  %1183 = vmatpush1.msra.mxu0 0.0
  %1184 = vmatprep.subr.mxu0 0.0
  %1185 = vmatpush1.msra.mxu0 0.0
  %1186 = vmatprep.subr.mxu0 0.0
  %1187 = vmatpush1.msra.mxu0 0.0
  %1188 = vmatprep.subr.mxu0 0.0
  %1189 = vmatpush1.msra.mxu0 0.0
  %1190 = vmatprep.subr.mxu0 0.0
  %1191 = vmatpush1.msra.mxu0 %v1158
  %1192 = vmatprep.subr.mxu0 0.0
  %1193 = vmatpush2.msra.mxu0 0.0
  %1194 = vmatprep.subr.mxu0 0.0
  %1195 = vmatpush2.msra.mxu0 0.0
  %1196 = vmatprep.subr.mxu0 0.0
  %1197 = vmatpush2.msra.mxu0 0.0
  %1198 = vmatprep.subr.mxu0 0.0
  %1199 = vmatpush2.msra.mxu0 0.0
  %1200 = vmatprep.subr.mxu0 0.0
  %1201 = vmatpush2.msra.mxu0 0.0
  %1202 = vmatprep.subr.mxu0 0.0
  %1203 = vmatpush2.msra.mxu0 0.0
  %1204 = vmatprep.subr.mxu0 0.0
  %1205 = vmatpush2.msra.mxu0 0.0
  %1206 = vmatprep.subr.mxu0 0.0
  %1207 = vmatpush2.msra.mxu0 0.0
  %1208 = vmatprep.subr.mxu0 0.0
  %1209 = vmatpush2.msra.mxu0 0.0
  %1210 = vmatprep.subr.mxu0 0.0
  %1211 = vmatpush2.msra.mxu0 0.0
  %1212 = vmatprep.subr.mxu0 0.0
  %1213 = vmatpush2.msra.mxu0 0.0
  %1214 = vmatprep.subr.mxu0 0.0
  %1215 = vmatpush2.msra.mxu0 0.0
  %1216 = vmatprep.subr.mxu0 0.0
  %1217 = vmatpush2.msra.mxu0 0.0
  %1218 = vmatprep.subr.mxu0 0.0
  %1219 = vmatpush2.msra.mxu0 0.0
  %1220 = vmatprep.subr.mxu0 0.0
  %1221 = vmatpush2.msra.mxu0 0.0
  %1222 = vmatprep.subr.mxu0 0.0
  %1223 = vmatpush2.msra.mxu0 0.0
  %1224 = vmatprep.mubr.f32.mxu0 0.0
  %1225 = vmatmul.mubr.f32.gmra.mxu0 %v1152
  %v1226 = vpop.f32.mrf.mxu0
  %v1227 = vadd.f32 %v1148, %v1226
  %v1228 = vpop.f32.mrf.mxu0
  %1229 = vmatprep.mubr.f32.mxu0 0.0
  %1230 = vmatmul.mubr.f32.gmra.mxu0 %v1155
  %v1231 = vpop.f32.mrf.mxu0
  %v1232 = vadd.f32 %v1148, %v1231
  %v1233 = vpop.f32.mrf.mxu0
  %1234 = vdwg.mxu0
  %v1235 = vld [vmem:[%s15] sm:$0xff]
  %v1236 = vld [vmem:[%s15 + $0x8] sm:$0xff]
  %v1237 = vld [vmem:[%s15 + $0x10] sm:$0xff]
  %v1238 = vld [vmem:[%s15 + $0x18] sm:$0xff]
  %v1239 = vld [vmem:[%s15 + $0x20] sm:$0xff]
  %v1240 = vld [vmem:[%s15 + $0x28] sm:$0xff]
  %v1241 = vld [vmem:[%s15 + $0x30] sm:$0xff]
  %v1242 = vld [vmem:[%s15 + $0x38] sm:$0xff]
  %v1243 = vld [vmem:[%s15 + $0x40] sm:$0xff]
  %v1244 = vld [vmem:[%s15 + $0x48] sm:$0xff]
  %v1245 = vld [vmem:[%s15 + $0x50] sm:$0xff]
  %v1246 = vld [vmem:[%s15 + $0x58] sm:$0xff]
  %v1247 = vld [vmem:[%s16] sm:$0xff]
  %v1248 = vld [vmem:[%s16 + $0x8] sm:$0xff]
  %v1249 = vld [vmem:[%s16 + $0x10] sm:$0xff]
  %v1250 = vld [vmem:[%s16 + $0x18] sm:$0xff]
  %v1251 = vld [vmem:[%s16 + $0x20] sm:$0xff]
  %v1252 = vld [vmem:[%s16 + $0x28] sm:$0xff]
  %v1253 = vld [vmem:[%s16 + $0x30] sm:$0xff]
  %v1254 = vld [vmem:[%s16 + $0x38] sm:$0xff]
  %v1255 = vld [vmem:[%s16 + $0x40] sm:$0xff]
  %v1256 = vld [vmem:[%s16 + $0x48] sm:$0xff]
  %v1257 = vld [vmem:[%s16 + $0x50] sm:$0xff]
  %v1258 = vld [vmem:[%s16 + $0x58] sm:$0xff]
  %1259 = vmatprep.subr.mxu0 0.0
  %1260 = vmatpush1.msra.mxu0 0.0
  %1261 = vmatprep.subr.mxu0 0.0
  %1262 = vmatpush1.msra.mxu0 0.0
  %1263 = vmatprep.subr.mxu0 0.0
  %1264 = vmatpush1.msra.mxu0 0.0
  %1265 = vmatprep.subr.mxu0 0.0
  %1266 = vmatpush1.msra.mxu0 0.0
  %1267 = vmatprep.subr.mxu0 0.0
  %1268 = vmatpush1.msra.mxu0 0.0
  %1269 = vmatprep.subr.mxu0 0.0
  %1270 = vmatpush1.msra.mxu0 0.0
  %1271 = vmatprep.subr.mxu0 0.0
  %1272 = vmatpush1.msra.mxu0 0.0
  %1273 = vmatprep.subr.mxu0 0.0
  %1274 = vmatpush1.msra.mxu0 0.0
  %1275 = vmatprep.subr.mxu0 0.0
  %1276 = vmatpush1.msra.mxu0 0.0
  %1277 = vmatprep.subr.mxu0 0.0
  %1278 = vmatpush1.msra.mxu0 0.0
  %1279 = vmatprep.subr.mxu0 0.0
  %1280 = vmatpush1.msra.mxu0 0.0
  %1281 = vmatprep.subr.mxu0 0.0
  %1282 = vmatpush1.msra.mxu0 0.0
  %1283 = vmatprep.subr.mxu0 %v1257
  %1284 = vmatpush1.msra.mxu0 %v1256
  %1285 = vmatprep.subr.mxu0 %v1254
  %1286 = vmatpush1.msra.mxu0 %v1253
  %1287 = vmatprep.subr.mxu0 %v1251
  %1288 = vmatpush1.msra.mxu0 %v1250
  %1289 = vmatprep.subr.mxu0 %v1248
  %1290 = vmatpush1.msra.mxu0 %v1247
  %1291 = vmatprep.subr.mxu0 0.0
  %1292 = vmatpush2.msra.mxu0 0.0
  %1293 = vmatprep.subr.mxu0 0.0
  %1294 = vmatpush2.msra.mxu0 0.0
  %1295 = vmatprep.subr.mxu0 0.0
  %1296 = vmatpush2.msra.mxu0 0.0
  %1297 = vmatprep.subr.mxu0 0.0
  %1298 = vmatpush2.msra.mxu0 0.0
  %1299 = vmatprep.subr.mxu0 0.0
  %1300 = vmatpush2.msra.mxu0 0.0
  %1301 = vmatprep.subr.mxu0 0.0
  %1302 = vmatpush2.msra.mxu0 0.0
  %1303 = vmatprep.subr.mxu0 0.0
  %1304 = vmatpush2.msra.mxu0 0.0
  %1305 = vmatprep.subr.mxu0 0.0
  %1306 = vmatpush2.msra.mxu0 0.0
  %1307 = vmatprep.subr.mxu0 0.0
  %1308 = vmatpush2.msra.mxu0 0.0
  %1309 = vmatprep.subr.mxu0 0.0
  %1310 = vmatpush2.msra.mxu0 0.0
  %1311 = vmatprep.subr.mxu0 0.0
  %1312 = vmatpush2.msra.mxu0 0.0
  %1313 = vmatprep.subr.mxu0 0.0
  %1314 = vmatpush2.msra.mxu0 0.0
  %1315 = vmatprep.subr.mxu0 0.0
  %1316 = vmatpush2.msra.mxu0 0.0
  %1317 = vmatprep.subr.mxu0 0.0
  %1318 = vmatpush2.msra.mxu0 0.0
  %1319 = vmatprep.subr.mxu0 0.0
  %1320 = vmatpush2.msra.mxu0 0.0
  %1321 = vmatprep.subr.mxu0 0.0
  %1322 = vmatpush2.msra.mxu0 0.0
  %1323 = vmatprep.mubr.f32.mxu0 0.0
  %1324 = vmatmul.mubr.f32.gmra.mxu0 %v314
  %v1325 = vpop.f32.mrf.mxu0
  %v1326 = vadd.f32 0.0, %v1325
  %v1327 = vpop.f32.mrf.mxu0
  %v1328 = vadd.f32 0.0, %v1327
  %1329 = vmatprep.mubr.f32.mxu0 0.0
  %1330 = vmatmul.mubr.f32.gmra.mxu0 %v317
  %v1331 = vpop.f32.mrf.mxu0
  %v1332 = vadd.f32 0.0, %v1331
  %v1333 = vpop.f32.mrf.mxu0
  %v1334 = vadd.f32 0.0, %v1333
  %1335 = vdwg.mxu0
  %1336 = vmatprep.subr.mxu0 0.0
  %1337 = vmatpush1.msra.mxu0 0.0
  %1338 = vmatprep.subr.mxu0 0.0
  %1339 = vmatpush1.msra.mxu0 0.0
  %1340 = vmatprep.subr.mxu0 0.0
  %1341 = vmatpush1.msra.mxu0 0.0
  %1342 = vmatprep.subr.mxu0 0.0
  %1343 = vmatpush1.msra.mxu0 0.0
  %1344 = vmatprep.subr.mxu0 0.0
  %1345 = vmatpush1.msra.mxu0 0.0
  %1346 = vmatprep.subr.mxu0 0.0
  %1347 = vmatpush1.msra.mxu0 0.0
  %1348 = vmatprep.subr.mxu0 0.0
  %1349 = vmatpush1.msra.mxu0 0.0
  %1350 = vmatprep.subr.mxu0 0.0
  %1351 = vmatpush1.msra.mxu0 0.0
  %1352 = vmatprep.subr.mxu0 0.0
  %1353 = vmatpush1.msra.mxu0 0.0
  %1354 = vmatprep.subr.mxu0 0.0
  %1355 = vmatpush1.msra.mxu0 0.0
  %1356 = vmatprep.subr.mxu0 0.0
  %1357 = vmatpush1.msra.mxu0 0.0
  %1358 = vmatprep.subr.mxu0 0.0
  %1359 = vmatpush1.msra.mxu0 0.0
  %1360 = vmatprep.subr.mxu0 0.0
  %1361 = vmatpush1.msra.mxu0 %v1258
  %1362 = vmatprep.subr.mxu0 0.0
  %1363 = vmatpush1.msra.mxu0 %v1255
  %1364 = vmatprep.subr.mxu0 0.0
  %1365 = vmatpush1.msra.mxu0 %v1252
  %1366 = vmatprep.subr.mxu0 0.0
  %1367 = vmatpush1.msra.mxu0 %v1249
  %1368 = vmatprep.subr.mxu0 0.0
  %1369 = vmatpush2.msra.mxu0 0.0
  %1370 = vmatprep.subr.mxu0 0.0
  %1371 = vmatpush2.msra.mxu0 0.0
  %1372 = vmatprep.subr.mxu0 0.0
  %1373 = vmatpush2.msra.mxu0 0.0
  %1374 = vmatprep.subr.mxu0 0.0
  %1375 = vmatpush2.msra.mxu0 0.0
  %1376 = vmatprep.subr.mxu0 0.0
  %1377 = vmatpush2.msra.mxu0 0.0
  %1378 = vmatprep.subr.mxu0 0.0
  %1379 = vmatpush2.msra.mxu0 0.0
  %1380 = vmatprep.subr.mxu0 0.0
  %1381 = vmatpush2.msra.mxu0 0.0
  %1382 = vmatprep.subr.mxu0 0.0
  %1383 = vmatpush2.msra.mxu0 0.0
  %1384 = vmatprep.subr.mxu0 0.0
  %1385 = vmatpush2.msra.mxu0 0.0
  %1386 = vmatprep.subr.mxu0 0.0
  %1387 = vmatpush2.msra.mxu0 0.0
  %1388 = vmatprep.subr.mxu0 0.0
  %1389 = vmatpush2.msra.mxu0 0.0
  %1390 = vmatprep.subr.mxu0 0.0
  %1391 = vmatpush2.msra.mxu0 0.0
  %1392 = vmatprep.subr.mxu0 0.0
  %1393 = vmatpush2.msra.mxu0 0.0
  %1394 = vmatprep.subr.mxu0 0.0
  %1395 = vmatpush2.msra.mxu0 0.0
  %1396 = vmatprep.subr.mxu0 0.0
  %1397 = vmatpush2.msra.mxu0 0.0
  %1398 = vmatprep.subr.mxu0 0.0
  %1399 = vmatpush2.msra.mxu0 0.0
  %1400 = vmatprep.mubr.f32.mxu0 0.0
  %1401 = vmatmul.mubr.f32.gmra.mxu0 %v314
  %v1402 = vpop.f32.mrf.mxu0
  %v1403 = vadd.f32 0.0, %v1402
  %v1404 = vpop.f32.mrf.mxu0
  %1405 = vmatprep.mubr.f32.mxu0 0.0
  %1406 = vmatmul.mubr.f32.gmra.mxu0 %v317
  %v1407 = vpop.f32.mrf.mxu0
  %v1408 = vadd.f32 0.0, %v1407
  %v1409 = vpop.f32.mrf.mxu0
  %1410 = vdwg.mxu0
  %1411 = vmatprep.subr.mxu0 0.0
  %1412 = vmatpush1.msra.mxu0 0.0
  %1413 = vmatprep.subr.mxu0 0.0
  %1414 = vmatpush1.msra.mxu0 0.0
  %1415 = vmatprep.subr.mxu0 0.0
  %1416 = vmatpush1.msra.mxu0 0.0
  %1417 = vmatprep.subr.mxu0 0.0
  %1418 = vmatpush1.msra.mxu0 0.0
  %1419 = vmatprep.subr.mxu0 0.0
  %1420 = vmatpush1.msra.mxu0 0.0
  %1421 = vmatprep.subr.mxu0 0.0
  %1422 = vmatpush1.msra.mxu0 0.0
  %1423 = vmatprep.subr.mxu0 0.0
  %1424 = vmatpush1.msra.mxu0 0.0
  %1425 = vmatprep.subr.mxu0 0.0
  %1426 = vmatpush1.msra.mxu0 0.0
  %1427 = vmatprep.subr.mxu0 0.0
  %1428 = vmatpush1.msra.mxu0 0.0
  %1429 = vmatprep.subr.mxu0 0.0
  %1430 = vmatpush1.msra.mxu0 0.0
  %1431 = vmatprep.subr.mxu0 0.0
  %1432 = vmatpush1.msra.mxu0 0.0
  %1433 = vmatprep.subr.mxu0 0.0
  %1434 = vmatpush1.msra.mxu0 0.0
  %1435 = vmatprep.subr.mxu0 %v1245
  %1436 = vmatpush1.msra.mxu0 %v1244
  %1437 = vmatprep.subr.mxu0 %v1242
  %1438 = vmatpush1.msra.mxu0 %v1241
  %1439 = vmatprep.subr.mxu0 %v1239
  %1440 = vmatpush1.msra.mxu0 %v1238
  %1441 = vmatprep.subr.mxu0 %v1236
  %1442 = vmatpush1.msra.mxu0 %v1235
  %1443 = vmatprep.subr.mxu0 0.0
  %1444 = vmatpush2.msra.mxu0 0.0
  %1445 = vmatprep.subr.mxu0 0.0
  %1446 = vmatpush2.msra.mxu0 0.0
  %1447 = vmatprep.subr.mxu0 0.0
  %1448 = vmatpush2.msra.mxu0 0.0
  %1449 = vmatprep.subr.mxu0 0.0
  %1450 = vmatpush2.msra.mxu0 0.0
  %1451 = vmatprep.subr.mxu0 0.0
  %1452 = vmatpush2.msra.mxu0 0.0
  %1453 = vmatprep.subr.mxu0 0.0
  %1454 = vmatpush2.msra.mxu0 0.0
  %1455 = vmatprep.subr.mxu0 0.0
  %1456 = vmatpush2.msra.mxu0 0.0
  %1457 = vmatprep.subr.mxu0 0.0
  %1458 = vmatpush2.msra.mxu0 0.0
  %1459 = vmatprep.subr.mxu0 0.0
  %1460 = vmatpush2.msra.mxu0 0.0
  %1461 = vmatprep.subr.mxu0 0.0
  %1462 = vmatpush2.msra.mxu0 0.0
  %1463 = vmatprep.subr.mxu0 0.0
  %1464 = vmatpush2.msra.mxu0 0.0
  %1465 = vmatprep.subr.mxu0 0.0
  %1466 = vmatpush2.msra.mxu0 0.0
  %1467 = vmatprep.subr.mxu0 0.0
  %1468 = vmatpush2.msra.mxu0 0.0
  %1469 = vmatprep.subr.mxu0 0.0
  %1470 = vmatpush2.msra.mxu0 0.0
  %1471 = vmatprep.subr.mxu0 0.0
  %1472 = vmatpush2.msra.mxu0 0.0
  %1473 = vmatprep.subr.mxu0 0.0
  %1474 = vmatpush2.msra.mxu0 0.0
  %1475 = vmatprep.mubr.f32.mxu0 0.0
  %1476 = vmatmul.mubr.f32.gmra.mxu0 %v472
  %v1477 = vpop.f32.mrf.mxu0
  %v1478 = vadd.f32 %v1326, %v1477
  %v1479 = vpop.f32.mrf.mxu0
  %v1480 = vadd.f32 %v1328, %v1479
  %1481 = vmatprep.mubr.f32.mxu0 0.0
  %1482 = vmatmul.mubr.f32.gmra.mxu0 %v475
  %v1483 = vpop.f32.mrf.mxu0
  %v1484 = vadd.f32 %v1332, %v1483
  %v1485 = vpop.f32.mrf.mxu0
  %v1486 = vadd.f32 %v1334, %v1485
  %1487 = vdwg.mxu0
  %1488 = vmatprep.subr.mxu0 0.0
  %1489 = vmatpush1.msra.mxu0 0.0
  %1490 = vmatprep.subr.mxu0 0.0
  %1491 = vmatpush1.msra.mxu0 0.0
  %1492 = vmatprep.subr.mxu0 0.0
  %1493 = vmatpush1.msra.mxu0 0.0
  %1494 = vmatprep.subr.mxu0 0.0
  %1495 = vmatpush1.msra.mxu0 0.0
  %1496 = vmatprep.subr.mxu0 0.0
  %1497 = vmatpush1.msra.mxu0 0.0
  %1498 = vmatprep.subr.mxu0 0.0
  %1499 = vmatpush1.msra.mxu0 0.0
  %1500 = vmatprep.subr.mxu0 0.0
  %1501 = vmatpush1.msra.mxu0 0.0
  %1502 = vmatprep.subr.mxu0 0.0
  %1503 = vmatpush1.msra.mxu0 0.0
  %1504 = vmatprep.subr.mxu0 0.0
  %1505 = vmatpush1.msra.mxu0 0.0
  %1506 = vmatprep.subr.mxu0 0.0
  %1507 = vmatpush1.msra.mxu0 0.0
  %1508 = vmatprep.subr.mxu0 0.0
  %1509 = vmatpush1.msra.mxu0 0.0
  %1510 = vmatprep.subr.mxu0 0.0
  %1511 = vmatpush1.msra.mxu0 0.0
  %1512 = vmatprep.subr.mxu0 0.0
  %1513 = vmatpush1.msra.mxu0 %v1246
  %1514 = vmatprep.subr.mxu0 0.0
  %1515 = vmatpush1.msra.mxu0 %v1243
  %1516 = vmatprep.subr.mxu0 0.0
  %1517 = vmatpush1.msra.mxu0 %v1240
  %1518 = vmatprep.subr.mxu0 0.0
  %1519 = vmatpush1.msra.mxu0 %v1237
  %1520 = vmatprep.subr.mxu0 0.0
  %1521 = vmatpush2.msra.mxu0 0.0
  %1522 = vmatprep.subr.mxu0 0.0
  %1523 = vmatpush2.msra.mxu0 0.0
  %1524 = vmatprep.subr.mxu0 0.0
  %1525 = vmatpush2.msra.mxu0 0.0
  %1526 = vmatprep.subr.mxu0 0.0
  %1527 = vmatpush2.msra.mxu0 0.0
  %1528 = vmatprep.subr.mxu0 0.0
  %1529 = vmatpush2.msra.mxu0 0.0
  %1530 = vmatprep.subr.mxu0 0.0
  %1531 = vmatpush2.msra.mxu0 0.0
  %1532 = vmatprep.subr.mxu0 0.0
  %1533 = vmatpush2.msra.mxu0 0.0
  %1534 = vmatprep.subr.mxu0 0.0
  %1535 = vmatpush2.msra.mxu0 0.0
  %1536 = vmatprep.subr.mxu0 0.0
  %1537 = vmatpush2.msra.mxu0 0.0
  %1538 = vmatprep.subr.mxu0 0.0
  %1539 = vmatpush2.msra.mxu0 0.0
  %1540 = vmatprep.subr.mxu0 0.0
  %1541 = vmatpush2.msra.mxu0 0.0
  %1542 = vmatprep.subr.mxu0 0.0
  %1543 = vmatpush2.msra.mxu0 0.0
  %1544 = vmatprep.subr.mxu0 0.0
  %1545 = vmatpush2.msra.mxu0 0.0
  %1546 = vmatprep.subr.mxu0 0.0
  %1547 = vmatpush2.msra.mxu0 0.0
  %1548 = vmatprep.subr.mxu0 0.0
  %1549 = vmatpush2.msra.mxu0 0.0
  %1550 = vmatprep.subr.mxu0 0.0
  %1551 = vmatpush2.msra.mxu0 0.0
  %1552 = vmatprep.mubr.f32.mxu0 0.0
  %1553 = vmatmul.mubr.f32.gmra.mxu0 %v472
  %v1554 = vpop.f32.mrf.mxu0
  %v1555 = vadd.f32 %v1403, %v1554
  %v1556 = vpop.f32.mrf.mxu0
  %1557 = vmatprep.mubr.f32.mxu0 0.0
  %1558 = vmatmul.mubr.f32.gmra.mxu0 %v475
  %v1559 = vpop.f32.mrf.mxu0
  %v1560 = vadd.f32 %v1408, %v1559
  %v1561 = vpop.f32.mrf.mxu0
  %1562 = vdwg.mxu0
  %v1563 = vld [vmem:[%s17] sm:$0x7]
  %v1565 = vlaneseq
  %v1566 = vshrl.u32 %v1565, 7
  %v1567 = vsub.s32 0, %v1566
  %v1568 = vrot.slane %v1563, %v1567
  %v1569 = vlaneseq
  %v1570 = vshrl.u32 %v1569, 7
  %v1571 = vsub.s32 1, %v1570
  %v1572 = vrot.slane %v1563, %v1571
  %v1573 = vlaneseq
  %v1574 = vshrl.u32 %v1573, 7
  %v1575 = vsub.s32 2, %v1574
  %v1576 = vrot.slane %v1563, %v1575
  %v1580 = vadd.f32 %v1478, %v1568
  %v1581 = vadd.f32 %v1480, %v1572
  %v1582 = vadd.f32 %v1555, %v1576
  %v1583 = vadd.f32 %v1484, %v1568
  %v1584 = vadd.f32 %v1486, %v1572
  %v1585 = vadd.f32 %v1560, %v1576
  %v1586 = vmax.f32 %v1580, 0.0
  %v1587 = vmax.f32 %v1581, 0.0
  %v1588 = vmax.f32 %v1582, 0.0
  %v1589 = vmax.f32 %v1583, 0.0
  %v1590 = vmax.f32 %v1584, 0.0
  %v1591 = vmax.f32 %v1585, 0.0
  %v1592 = vld [vmem:[%s18] sm:$0xff]
  %v1593 = vld [vmem:[%s18 + $0x8] sm:$0xff]
  %v1594 = vld [vmem:[%s18 + $0x10] sm:$0xff]
  %v1595 = vld [vmem:[%s18 + $0x18] sm:$0xff]
  %v1596 = vld [vmem:[%s18 + $0x20] sm:$0xff]
  %v1597 = vld [vmem:[%s18 + $0x28] sm:$0xff]
  %v1598 = vld [vmem:[%s18 + $0x30] sm:$0xff]
  %v1599 = vld [vmem:[%s18 + $0x38] sm:$0xff]
  %v1600 = vld [vmem:[%s18 + $0x40] sm:$0xff]
  %v1601 = vld [vmem:[%s18 + $0x48] sm:$0xff]
  %v1602 = vld [vmem:[%s18 + $0x50] sm:$0xff]
  %v1603 = vld [vmem:[%s18 + $0x58] sm:$0xff]
  %v1604 = vld [vmem:[%s18 + $0x60] sm:$0xff]
  %v1605 = vld [vmem:[%s18 + $0x68] sm:$0xff]
  %v1606 = vld [vmem:[%s18 + $0x70] sm:$0xff]
  %v1607 = vld [vmem:[%s18 + $0x78] sm:$0xff]
  %v1608 = vld [vmem:[%s18 + $0x80] sm:$0xff]
  %v1609 = vld [vmem:[%s18 + $0x88] sm:$0xff]
  %v1610 = vld [vmem:[%s18 + $0x90] sm:$0xff]
  %v1611 = vld [vmem:[%s18 + $0x98] sm:$0xff]
  %v1612 = vld [vmem:[%s18 + $0xa0] sm:$0xff]
  %v1613 = vld [vmem:[%s18 + $0xa8] sm:$0xff]
  %v1614 = vld [vmem:[%s18 + $0xb0] sm:$0xff]
  %v1615 = vld [vmem:[%s18 + $0xb8] sm:$0xff]
  %v1616 = vld [vmem:[%s18 + $0xc0] sm:$0xff]
  %v1617 = vld [vmem:[%s18 + $0xc8] sm:$0xff]
  %v1618 = vld [vmem:[%s18 + $0xd0] sm:$0xff]
  %v1619 = vld [vmem:[%s18 + $0xd8] sm:$0xff]
  %v1620 = vld [vmem:[%s18 + $0xe0] sm:$0xff]
  %v1621 = vld [vmem:[%s18 + $0xe8] sm:$0xff]
  %v1622 = vld [vmem:[%s18 + $0xf0] sm:$0xff]
  %v1623 = vld [vmem:[%s18 + $0xf8] sm:$0xff]
  %v1624 = vld [vmem:[%s18 + $0x100] sm:$0xff]
  %v1625 = vld [vmem:[%s18 + $0x108] sm:$0xff]
  %v1626 = vld [vmem:[%s18 + $0x110] sm:$0xff]
  %v1627 = vld [vmem:[%s18 + $0x118] sm:$0xff]
  %v1628 = vld [vmem:[%s18 + $0x120] sm:$0xff]
  %v1629 = vld [vmem:[%s18 + $0x128] sm:$0xff]
  %v1630 = vld [vmem:[%s18 + $0x130] sm:$0xff]
  %v1631 = vld [vmem:[%s18 + $0x138] sm:$0xff]
  %v1632 = vld [vmem:[%s18 + $0x140] sm:$0xff]
  %v1633 = vld [vmem:[%s18 + $0x148] sm:$0xff]
  %v1634 = vld [vmem:[%s18 + $0x150] sm:$0xff]
  %v1635 = vld [vmem:[%s18 + $0x158] sm:$0xff]
  %v1636 = vld [vmem:[%s18 + $0x160] sm:$0xff]
  %v1637 = vld [vmem:[%s18 + $0x168] sm:$0xff]
  %v1638 = vld [vmem:[%s18 + $0x170] sm:$0xff]
  %v1639 = vld [vmem:[%s18 + $0x178] sm:$0xff]
  %v1640 = vld [vmem:[%s18 + $0x180] sm:$0xff]
  %v1641 = vld [vmem:[%s18 + $0x188] sm:$0xff]
  %v1642 = vld [vmem:[%s18 + $0x190] sm:$0xff]
  %v1643 = vld [vmem:[%s18 + $0x198] sm:$0xff]
  %v1644 = vld [vmem:[%s18 + $0x1a0] sm:$0xff]
  %v1645 = vld [vmem:[%s18 + $0x1a8] sm:$0xff]
  %v1646 = vld [vmem:[%s18 + $0x1b0] sm:$0xff]
  %v1647 = vld [vmem:[%s18 + $0x1b8] sm:$0xff]
  %v1648 = vld [vmem:[%s18 + $0x1c0] sm:$0xff]
  %v1649 = vld [vmem:[%s18 + $0x1c8] sm:$0xff]
  %v1650 = vld [vmem:[%s18 + $0x1d0] sm:$0xff]
  %v1651 = vld [vmem:[%s18 + $0x1d8] sm:$0xff]
  %v1652 = vld [vmem:[%s18 + $0x1e0] sm:$0xff]
  %v1653 = vld [vmem:[%s18 + $0x1e8] sm:$0xff]
  %v1654 = vld [vmem:[%s18 + $0x1f0] sm:$0xff]
  %v1655 = vld [vmem:[%s18 + $0x1f8] sm:$0xff]
  %v1656 = vld [vmem:[%s18 + $0x200] sm:$0xff]
  %v1657 = vld [vmem:[%s18 + $0x208] sm:$0xff]
  %v1658 = vld [vmem:[%s18 + $0x210] sm:$0xff]
  %v1659 = vld [vmem:[%s18 + $0x218] sm:$0xff]
  %v1660 = vld [vmem:[%s18 + $0x220] sm:$0xff]
  %v1661 = vld [vmem:[%s18 + $0x228] sm:$0xff]
  %v1662 = vld [vmem:[%s18 + $0x230] sm:$0xff]
  %v1663 = vld [vmem:[%s18 + $0x238] sm:$0xff]
  %v1664 = vld [vmem:[%s18 + $0x240] sm:$0xff]
  %v1665 = vld [vmem:[%s18 + $0x248] sm:$0xff]
  %v1666 = vld [vmem:[%s18 + $0x250] sm:$0xff]
  %v1667 = vld [vmem:[%s18 + $0x258] sm:$0xff]
  %v1668 = vld [vmem:[%s18 + $0x260] sm:$0xff]
  %v1669 = vld [vmem:[%s18 + $0x268] sm:$0xff]
  %v1670 = vld [vmem:[%s18 + $0x270] sm:$0xff]
  %v1671 = vld [vmem:[%s18 + $0x278] sm:$0xff]
  %v1672 = vld [vmem:[%s18 + $0x280] sm:$0xff]
  %v1673 = vld [vmem:[%s18 + $0x288] sm:$0xff]
  %v1674 = vld [vmem:[%s18 + $0x290] sm:$0xff]
  %v1675 = vld [vmem:[%s18 + $0x298] sm:$0xff]
  %v1676 = vld [vmem:[%s18 + $0x2a0] sm:$0xff]
  %v1677 = vld [vmem:[%s18 + $0x2a8] sm:$0xff]
  %v1678 = vld [vmem:[%s18 + $0x2b0] sm:$0xff]
  %v1679 = vld [vmem:[%s18 + $0x2b8] sm:$0xff]
  %v1680 = vld [vmem:[%s18 + $0x2c0] sm:$0xff]
  %v1681 = vld [vmem:[%s18 + $0x2c8] sm:$0xff]
  %v1682 = vld [vmem:[%s19] sm:$0x3]
  %v1684 = vlaneseq
  %v1685 = vshrl.u32 %v1684, 7
  %v1686 = vsub.s32 0, %v1685
  %v1687 = vrot.slane %v1682, %v1686
  %v1688 = vlaneseq
  %v1689 = vshrl.u32 %v1688, 7
  %v1690 = vsub.s32 1, %v1689
  %v1691 = vrot.slane %v1682, %v1690
  %v1695 = vsel %vm760, %v1588, 0
  %v1698 = vsel %vm760, %v1591, 0
  %1700 = vmatprep.subr.mxu0 %v1623
  %1701 = vmatpush1.msra.mxu0 %v1622
  %1702 = vmatprep.subr.mxu0 %v1621
  %1703 = vmatpush1.msra.mxu0 %v1620
  %1704 = vmatprep.subr.mxu0 %v1619
  %1705 = vmatpush1.msra.mxu0 %v1618
  %1706 = vmatprep.subr.mxu0 %v1617
  %1707 = vmatpush1.msra.mxu0 %v1616
  %1708 = vmatprep.subr.mxu0 %v1615
  %1709 = vmatpush1.msra.mxu0 %v1614
  %1710 = vmatprep.subr.mxu0 %v1613
  %1711 = vmatpush1.msra.mxu0 %v1612
  %1712 = vmatprep.subr.mxu0 %v1611
  %1713 = vmatpush1.msra.mxu0 %v1610
  %1714 = vmatprep.subr.mxu0 %v1609
  %1715 = vmatpush1.msra.mxu0 %v1608
  %1716 = vmatprep.subr.mxu0 %v1607
  %1717 = vmatpush1.msra.mxu0 %v1606
  %1718 = vmatprep.subr.mxu0 %v1605
  %1719 = vmatpush1.msra.mxu0 %v1604
  %1720 = vmatprep.subr.mxu0 %v1603
  %1721 = vmatpush1.msra.mxu0 %v1602
  %1722 = vmatprep.subr.mxu0 %v1601
  %1723 = vmatpush1.msra.mxu0 %v1600
  %1724 = vmatprep.subr.mxu0 %v1599
  %1725 = vmatpush1.msra.mxu0 %v1598
  %1726 = vmatprep.subr.mxu0 %v1597
  %1727 = vmatpush1.msra.mxu0 %v1596
  %1728 = vmatprep.subr.mxu0 %v1595
  %1729 = vmatpush1.msra.mxu0 %v1594
  %1730 = vmatprep.subr.mxu0 %v1593
  %1731 = vmatpush1.msra.mxu0 %v1592
  %1732 = vmatprep.subr.mxu0 %v1655
  %1733 = vmatpush2.msra.mxu0 %v1654
  %1734 = vmatprep.subr.mxu0 %v1653
  %1735 = vmatpush2.msra.mxu0 %v1652
  %1736 = vmatprep.subr.mxu0 %v1651
  %1737 = vmatpush2.msra.mxu0 %v1650
  %1738 = vmatprep.subr.mxu0 %v1649
  %1739 = vmatpush2.msra.mxu0 %v1648
  %1740 = vmatprep.subr.mxu0 %v1647
  %1741 = vmatpush2.msra.mxu0 %v1646
  %1742 = vmatprep.subr.mxu0 %v1645
  %1743 = vmatpush2.msra.mxu0 %v1644
  %1744 = vmatprep.subr.mxu0 %v1643
  %1745 = vmatpush2.msra.mxu0 %v1642
  %1746 = vmatprep.subr.mxu0 %v1641
  %1747 = vmatpush2.msra.mxu0 %v1640
  %1748 = vmatprep.subr.mxu0 %v1639
  %1749 = vmatpush2.msra.mxu0 %v1638
  %1750 = vmatprep.subr.mxu0 %v1637
  %1751 = vmatpush2.msra.mxu0 %v1636
  %1752 = vmatprep.subr.mxu0 %v1635
  %1753 = vmatpush2.msra.mxu0 %v1634
  %1754 = vmatprep.subr.mxu0 %v1633
  %1755 = vmatpush2.msra.mxu0 %v1632
  %1756 = vmatprep.subr.mxu0 %v1631
  %1757 = vmatpush2.msra.mxu0 %v1630
  %1758 = vmatprep.subr.mxu0 %v1629
  %1759 = vmatpush2.msra.mxu0 %v1628
  %1760 = vmatprep.subr.mxu0 %v1627
  %1761 = vmatpush2.msra.mxu0 %v1626
  %1762 = vmatprep.subr.mxu0 %v1625
  %1763 = vmatpush2.msra.mxu0 %v1624
  %1764 = vmatprep.mubr.f32.mxu0 %v1587
  %1765 = vmatmul.mubr.f32.gmra.mxu0 %v1586
  %v1766 = vpop.f32.mrf.mxu0
  %v1767 = vadd.f32 %v1687, %v1766
  %v1768 = vpop.f32.mrf.mxu0
  %v1769 = vadd.f32 %v1691, %v1768
  %1770 = vmatprep.mubr.f32.mxu0 %v1590
  %1771 = vmatmul.mubr.f32.gmra.mxu0 %v1589
  %v1772 = vpop.f32.mrf.mxu0
  %v1773 = vadd.f32 %v1687, %v1772
  %v1774 = vpop.f32.mrf.mxu0
  %v1775 = vadd.f32 %v1691, %v1774
  %1776 = vdwg.mxu0
  %1777 = vmatprep.subr.mxu0 0.0
  %1778 = vmatpush1.msra.mxu0 0.0
  %1779 = vmatprep.subr.mxu0 0.0
  %1780 = vmatpush1.msra.mxu0 0.0
  %1781 = vmatprep.subr.mxu0 0.0
  %1782 = vmatpush1.msra.mxu0 0.0
  %1783 = vmatprep.subr.mxu0 %v1681
  %1784 = vmatpush1.msra.mxu0 %v1680
  %1785 = vmatprep.subr.mxu0 %v1679
  %1786 = vmatpush1.msra.mxu0 %v1678
  %1787 = vmatprep.subr.mxu0 %v1677
  %1788 = vmatpush1.msra.mxu0 %v1676
  %1789 = vmatprep.subr.mxu0 %v1675
  %1790 = vmatpush1.msra.mxu0 %v1674
  %1791 = vmatprep.subr.mxu0 %v1673
  %1792 = vmatpush1.msra.mxu0 %v1672
  %1793 = vmatprep.subr.mxu0 %v1671
  %1794 = vmatpush1.msra.mxu0 %v1670
  %1795 = vmatprep.subr.mxu0 %v1669
  %1796 = vmatpush1.msra.mxu0 %v1668
  %1797 = vmatprep.subr.mxu0 %v1667
  %1798 = vmatpush1.msra.mxu0 %v1666
  %1799 = vmatprep.subr.mxu0 %v1665
  %1800 = vmatpush1.msra.mxu0 %v1664
  %1801 = vmatprep.subr.mxu0 %v1663
  %1802 = vmatpush1.msra.mxu0 %v1662
  %1803 = vmatprep.subr.mxu0 %v1661
  %1804 = vmatpush1.msra.mxu0 %v1660
  %1805 = vmatprep.subr.mxu0 %v1659
  %1806 = vmatpush1.msra.mxu0 %v1658
  %1807 = vmatprep.subr.mxu0 %v1657
  %1808 = vmatpush1.msra.mxu0 %v1656
  %1809 = vmatprep.subr.mxu0 0.0
  %1810 = vmatpush2.msra.mxu0 0.0
  %1811 = vmatprep.subr.mxu0 0.0
  %1812 = vmatpush2.msra.mxu0 0.0
  %1813 = vmatprep.subr.mxu0 0.0
  %1814 = vmatpush2.msra.mxu0 0.0
  %1815 = vmatprep.subr.mxu0 0.0
  %1816 = vmatpush2.msra.mxu0 0.0
  %1817 = vmatprep.subr.mxu0 0.0
  %1818 = vmatpush2.msra.mxu0 0.0
  %1819 = vmatprep.subr.mxu0 0.0
  %1820 = vmatpush2.msra.mxu0 0.0
  %1821 = vmatprep.subr.mxu0 0.0
  %1822 = vmatpush2.msra.mxu0 0.0
  %1823 = vmatprep.subr.mxu0 0.0
  %1824 = vmatpush2.msra.mxu0 0.0
  %1825 = vmatprep.subr.mxu0 0.0
  %1826 = vmatpush2.msra.mxu0 0.0
  %1827 = vmatprep.subr.mxu0 0.0
  %1828 = vmatpush2.msra.mxu0 0.0
  %1829 = vmatprep.subr.mxu0 0.0
  %1830 = vmatpush2.msra.mxu0 0.0
  %1831 = vmatprep.subr.mxu0 0.0
  %1832 = vmatpush2.msra.mxu0 0.0
  %1833 = vmatprep.subr.mxu0 0.0
  %1834 = vmatpush2.msra.mxu0 0.0
  %1835 = vmatprep.subr.mxu0 0.0
  %1836 = vmatpush2.msra.mxu0 0.0
  %1837 = vmatprep.subr.mxu0 0.0
  %1838 = vmatpush2.msra.mxu0 0.0
  %1839 = vmatprep.subr.mxu0 0.0
  %1840 = vmatpush2.msra.mxu0 0.0
  %1841 = vmatprep.mubr.f32.mxu0 0.0
  %1842 = vmatmul.mubr.f32.gmra.mxu0 %v1695
  %v1843 = vpop.f32.mrf.mxu0
  %v1844 = vadd.f32 %v1767, %v1843
  %v1845 = vpop.f32.mrf.mxu0
  %v1846 = vadd.f32 %v1769, %v1845
  %1847 = vmatprep.mubr.f32.mxu0 0.0
  %1848 = vmatmul.mubr.f32.gmra.mxu0 %v1698
  %v1849 = vpop.f32.mrf.mxu0
  %v1850 = vadd.f32 %v1773, %v1849
  %v1851 = vpop.f32.mrf.mxu0
  %v1852 = vadd.f32 %v1775, %v1851
  %1853 = vdwg.mxu0
  %v1854 = vmax.f32 %v1844, 0.0
  %v1855 = vmax.f32 %v1846, 0.0
  %v1856 = vmax.f32 %v1850, 0.0
  %v1857 = vmax.f32 %v1852, 0.0
  %v1858 = vld [vmem:[%s20] sm:$0xff]
  %v1859 = vld [vmem:[%s20 + $0x8] sm:$0xff]
  %v1860 = vld [vmem:[%s20 + $0x10] sm:$0xff]
  %v1861 = vld [vmem:[%s20 + $0x18] sm:$0xff]
  %v1862 = vld [vmem:[%s20 + $0x20] sm:$0xff]
  %v1863 = vld [vmem:[%s20 + $0x28] sm:$0xff]
  %v1864 = vld [vmem:[%s20 + $0x30] sm:$0xff]
  %v1865 = vld [vmem:[%s20 + $0x38] sm:$0xff]
  %v1866 = vld [vmem:[%s20 + $0x40] sm:$0xff]
  %v1867 = vld [vmem:[%s20 + $0x48] sm:$0xff]
  %v1868 = vld [vmem:[%s20 + $0x50] sm:$0xff]
  %v1869 = vld [vmem:[%s20 + $0x58] sm:$0xff]
  %v1870 = vld [vmem:[%s20 + $0x60] sm:$0xff]
  %v1871 = vld [vmem:[%s20 + $0x68] sm:$0xff]
  %v1872 = vld [vmem:[%s20 + $0x70] sm:$0xff]
  %v1873 = vld [vmem:[%s20 + $0x78] sm:$0xff]
  %v1874 = vld [vmem:[%s20 + $0x80] sm:$0xff]
  %v1875 = vld [vmem:[%s20 + $0x88] sm:$0xff]
  %v1876 = vld [vmem:[%s20 + $0x90] sm:$0xff]
  %v1877 = vld [vmem:[%s20 + $0x98] sm:$0xff]
  %v1878 = vld [vmem:[%s20 + $0xa0] sm:$0xff]
  %v1879 = vld [vmem:[%s20 + $0xa8] sm:$0xff]
  %v1880 = vld [vmem:[%s20 + $0xb0] sm:$0xff]
  %v1881 = vld [vmem:[%s20 + $0xb8] sm:$0xff]
  %v1882 = vld [vmem:[%s20 + $0xc0] sm:$0xff]
  %v1883 = vld [vmem:[%s21] sm:$0x1]
  %v1885 = vlaneseq
  %v1886 = vshrl.u32 %v1885, 7
  %v1887 = vsub.s32 0, %v1886
  %v1888 = vrot.slane %v1883, %v1887
  %v1891 = vsel %vm957, %v1855, 0
  %v1894 = vsel %vm957, %v1857, 0
  %1896 = vmatprep.subr.mxu0 0.0
  %1897 = vmatpush1.msra.mxu0 %v1873
  %1898 = vmatprep.subr.mxu0 0.0
  %1899 = vmatpush1.msra.mxu0 %v1872
  %1900 = vmatprep.subr.mxu0 0.0
  %1901 = vmatpush1.msra.mxu0 %v1871
  %1902 = vmatprep.subr.mxu0 0.0
  %1903 = vmatpush1.msra.mxu0 %v1870
  %1904 = vmatprep.subr.mxu0 0.0
  %1905 = vmatpush1.msra.mxu0 %v1869
  %1906 = vmatprep.subr.mxu0 0.0
  %1907 = vmatpush1.msra.mxu0 %v1868
  %1908 = vmatprep.subr.mxu0 0.0
  %1909 = vmatpush1.msra.mxu0 %v1867
  %1910 = vmatprep.subr.mxu0 0.0
  %1911 = vmatpush1.msra.mxu0 %v1866
  %1912 = vmatprep.subr.mxu0 0.0
  %1913 = vmatpush1.msra.mxu0 %v1865
  %1914 = vmatprep.subr.mxu0 0.0
  %1915 = vmatpush1.msra.mxu0 %v1864
  %1916 = vmatprep.subr.mxu0 0.0
  %1917 = vmatpush1.msra.mxu0 %v1863
  %1918 = vmatprep.subr.mxu0 0.0
  %1919 = vmatpush1.msra.mxu0 %v1862
  %1920 = vmatprep.subr.mxu0 0.0
  %1921 = vmatpush1.msra.mxu0 %v1861
  %1922 = vmatprep.subr.mxu0 0.0
  %1923 = vmatpush1.msra.mxu0 %v1860
  %1924 = vmatprep.subr.mxu0 0.0
  %1925 = vmatpush1.msra.mxu0 %v1859
  %1926 = vmatprep.subr.mxu0 0.0
  %1927 = vmatpush1.msra.mxu0 %v1858
  %1928 = vmatprep.subr.mxu0 0.0
  %1929 = vmatpush2.msra.mxu0 0.0
  %1930 = vmatprep.subr.mxu0 0.0
  %1931 = vmatpush2.msra.mxu0 0.0
  %1932 = vmatprep.subr.mxu0 0.0
  %1933 = vmatpush2.msra.mxu0 0.0
  %1934 = vmatprep.subr.mxu0 0.0
  %1935 = vmatpush2.msra.mxu0 0.0
  %1936 = vmatprep.subr.mxu0 0.0
  %1937 = vmatpush2.msra.mxu0 0.0
  %1938 = vmatprep.subr.mxu0 0.0
  %1939 = vmatpush2.msra.mxu0 0.0
  %1940 = vmatprep.subr.mxu0 0.0
  %1941 = vmatpush2.msra.mxu0 0.0
  %1942 = vmatprep.subr.mxu0 0.0
  %1943 = vmatpush2.msra.mxu0 %v1882
  %1944 = vmatprep.subr.mxu0 0.0
  %1945 = vmatpush2.msra.mxu0 %v1881
  %1946 = vmatprep.subr.mxu0 0.0
  %1947 = vmatpush2.msra.mxu0 %v1880
  %1948 = vmatprep.subr.mxu0 0.0
  %1949 = vmatpush2.msra.mxu0 %v1879
  %1950 = vmatprep.subr.mxu0 0.0
  %1951 = vmatpush2.msra.mxu0 %v1878
  %1952 = vmatprep.subr.mxu0 0.0
  %1953 = vmatpush2.msra.mxu0 %v1877
  %1954 = vmatprep.subr.mxu0 0.0
  %1955 = vmatpush2.msra.mxu0 %v1876
  %1956 = vmatprep.subr.mxu0 0.0
  %1957 = vmatpush2.msra.mxu0 %v1875
  %1958 = vmatprep.subr.mxu0 0.0
  %1959 = vmatpush2.msra.mxu0 %v1874
  %1960 = vmatprep.mubr.f32.mxu0 %v1891
  %1961 = vmatmul.mubr.f32.gmra.mxu0 %v1854
  %v1962 = vpop.f32.mrf.mxu0
  %v1963 = vadd.f32 %v1888, %v1962
  %v1964 = vpop.f32.mrf.mxu0
  %1965 = vmatprep.mubr.f32.mxu0 %v1894
  %1966 = vmatmul.mubr.f32.gmra.mxu0 %v1856
  %v1967 = vpop.f32.mrf.mxu0
  %v1968 = vadd.f32 %v1888, %v1967
  %v1969 = vpop.f32.mrf.mxu0
  %1970 = vdwg.mxu0
  %v1971 = vmax.f32 %v1963, 0.0
  %v1972 = vmax.f32 %v1968, 0.0
  %v1973 = vld [vmem:[%s22] sm:$0xff]
  %v1974 = vld [vmem:[%s22 + $0x8] sm:$0xff]
  %v1975 = vld [vmem:[%s22 + $0x10] sm:$0xff]
  %v1976 = vld [vmem:[%s22 + $0x18] sm:$0xff]
  %v1977 = vld [vmem:[%s22 + $0x20] sm:$0xff]
  %v1978 = vld [vmem:[%s22 + $0x28] sm:$0xff]
  %v1979 = vld [vmem:[%s22 + $0x30] sm:$0xff]
  %v1980 = vld [vmem:[%s22 + $0x38] sm:$0xff]
  %v1981 = vld [vmem:[%s22 + $0x40] sm:$0xff]
  %v1982 = vld [vmem:[%s22 + $0x48] sm:$0xff]
  %v1983 = vld [vmem:[%s23] sm:$0x1]
  %v1985 = vlaneseq
  %v1986 = vshrl.u32 %v1985, 7
  %v1987 = vsub.s32 0, %v1986
  %v1988 = vrot.slane %v1983, %v1987
  %v1991 = vsel %vm1058, %v1971, 0
  %v1994 = vsel %vm1058, %v1972, 0
  %1996 = vmatprep.subr.mxu0 0.0
  %1997 = vmatpush1.msra.mxu0 0.0
  %1998 = vmatprep.subr.mxu0 0.0
  %1999 = vmatpush1.msra.mxu0 0.0
  %2000 = vmatprep.subr.mxu0 0.0
  %2001 = vmatpush1.msra.mxu0 0.0
  %2002 = vmatprep.subr.mxu0 0.0
  %2003 = vmatpush1.msra.mxu0 0.0
  %2004 = vmatprep.subr.mxu0 0.0
  %2005 = vmatpush1.msra.mxu0 0.0
  %2006 = vmatprep.subr.mxu0 0.0
  %2007 = vmatpush1.msra.mxu0 0.0
  %2008 = vmatprep.subr.mxu0 0.0
  %2009 = vmatpush1.msra.mxu0 %v1982
  %2010 = vmatprep.subr.mxu0 0.0
  %2011 = vmatpush1.msra.mxu0 %v1981
  %2012 = vmatprep.subr.mxu0 0.0
  %2013 = vmatpush1.msra.mxu0 %v1980
  %2014 = vmatprep.subr.mxu0 0.0
  %2015 = vmatpush1.msra.mxu0 %v1979
  %2016 = vmatprep.subr.mxu0 0.0
  %2017 = vmatpush1.msra.mxu0 %v1978
  %2018 = vmatprep.subr.mxu0 0.0
  %2019 = vmatpush1.msra.mxu0 %v1977
  %2020 = vmatprep.subr.mxu0 0.0
  %2021 = vmatpush1.msra.mxu0 %v1976
  %2022 = vmatprep.subr.mxu0 0.0
  %2023 = vmatpush1.msra.mxu0 %v1975
  %2024 = vmatprep.subr.mxu0 0.0
  %2025 = vmatpush1.msra.mxu0 %v1974
  %2026 = vmatprep.subr.mxu0 0.0
  %2027 = vmatpush1.msra.mxu0 %v1973
  %2028 = vmatprep.subr.mxu0 0.0
  %2029 = vmatpush2.msra.mxu0 0.0
  %2030 = vmatprep.subr.mxu0 0.0
  %2031 = vmatpush2.msra.mxu0 0.0
  %2032 = vmatprep.subr.mxu0 0.0
  %2033 = vmatpush2.msra.mxu0 0.0
  %2034 = vmatprep.subr.mxu0 0.0
  %2035 = vmatpush2.msra.mxu0 0.0
  %2036 = vmatprep.subr.mxu0 0.0
  %2037 = vmatpush2.msra.mxu0 0.0
  %2038 = vmatprep.subr.mxu0 0.0
  %2039 = vmatpush2.msra.mxu0 0.0
  %2040 = vmatprep.subr.mxu0 0.0
  %2041 = vmatpush2.msra.mxu0 0.0
  %2042 = vmatprep.subr.mxu0 0.0
  %2043 = vmatpush2.msra.mxu0 0.0
  %2044 = vmatprep.subr.mxu0 0.0
  %2045 = vmatpush2.msra.mxu0 0.0
  %2046 = vmatprep.subr.mxu0 0.0
  %2047 = vmatpush2.msra.mxu0 0.0
  %2048 = vmatprep.subr.mxu0 0.0
  %2049 = vmatpush2.msra.mxu0 0.0
  %2050 = vmatprep.subr.mxu0 0.0
  %2051 = vmatpush2.msra.mxu0 0.0
  %2052 = vmatprep.subr.mxu0 0.0
  %2053 = vmatpush2.msra.mxu0 0.0
  %2054 = vmatprep.subr.mxu0 0.0
  %2055 = vmatpush2.msra.mxu0 0.0
  %2056 = vmatprep.subr.mxu0 0.0
  %2057 = vmatpush2.msra.mxu0 0.0
  %2058 = vmatprep.subr.mxu0 0.0
  %2059 = vmatpush2.msra.mxu0 0.0
  %2060 = vmatprep.mubr.f32.mxu0 0.0
  %2061 = vmatmul.mubr.f32.gmra.mxu0 %v1991
  %v2062 = vpop.f32.mrf.mxu0
  %v2063 = vadd.f32 %v1988, %v2062
  %v2064 = vpop.f32.mrf.mxu0
  %2065 = vmatprep.mubr.f32.mxu0 0.0
  %2066 = vmatmul.mubr.f32.gmra.mxu0 %v1994
  %v2067 = vpop.f32.mrf.mxu0
  %v2068 = vadd.f32 %v1988, %v2067
  %v2069 = vpop.f32.mrf.mxu0
  %2070 = vdwg.mxu0
  %v2071 = vmax.f32 %v2063, 0.0
  %v2072 = vmax.f32 %v2068, 0.0
  %v2073 = vld [vmem:[%s24] sm:$0x3]
  %v2074 = vld [vmem:[#allocation3] sm:$0x1]
  %v2076 = vlaneseq
  %v2077 = vshrl.u32 %v2076, 7
  %v2078 = vsub.s32 0, %v2077
  %v2079 = vrot.slane %v2074, %v2078
  %v2082 = vsel %vm1150, %v2071, 0
  %v2085 = vsel %vm1150, %v2072, 0
  %v2088 = vsel %vm209, %v2073, 0
  %2090 = vmatprep.subr.mxu0 0.0
  %2091 = vmatpush1.msra.mxu0 0.0
  %2092 = vmatprep.subr.mxu0 0.0
  %2093 = vmatpush1.msra.mxu0 0.0
  %2094 = vmatprep.subr.mxu0 0.0
  %2095 = vmatpush1.msra.mxu0 0.0
  %2096 = vmatprep.subr.mxu0 0.0
  %2097 = vmatpush1.msra.mxu0 0.0
  %2098 = vmatprep.subr.mxu0 0.0
  %2099 = vmatpush1.msra.mxu0 0.0
  %2100 = vmatprep.subr.mxu0 0.0
  %2101 = vmatpush1.msra.mxu0 0.0
  %2102 = vmatprep.subr.mxu0 0.0
  %2103 = vmatpush1.msra.mxu0 0.0
  %2104 = vmatprep.subr.mxu0 0.0
  %2105 = vmatpush1.msra.mxu0 0.0
  %2106 = vmatprep.subr.mxu0 0.0
  %2107 = vmatpush1.msra.mxu0 0.0
  %2108 = vmatprep.subr.mxu0 0.0
  %2109 = vmatpush1.msra.mxu0 0.0
  %2110 = vmatprep.subr.mxu0 0.0
  %2111 = vmatpush1.msra.mxu0 0.0
  %2112 = vmatprep.subr.mxu0 0.0
  %2113 = vmatpush1.msra.mxu0 0.0
  %2114 = vmatprep.subr.mxu0 0.0
  %2115 = vmatpush1.msra.mxu0 0.0
  %2116 = vmatprep.subr.mxu0 0.0
  %2117 = vmatpush1.msra.mxu0 0.0
  %2118 = vmatprep.subr.mxu0 0.0
  %2119 = vmatpush1.msra.mxu0 0.0
  %2120 = vmatprep.subr.mxu0 0.0
  %2121 = vmatpush1.msra.mxu0 %v2088
  %2122 = vmatprep.subr.mxu0 0.0
  %2123 = vmatpush2.msra.mxu0 0.0
  %2124 = vmatprep.subr.mxu0 0.0
  %2125 = vmatpush2.msra.mxu0 0.0
  %2126 = vmatprep.subr.mxu0 0.0
  %2127 = vmatpush2.msra.mxu0 0.0
  %2128 = vmatprep.subr.mxu0 0.0
  %2129 = vmatpush2.msra.mxu0 0.0
  %2130 = vmatprep.subr.mxu0 0.0
  %2131 = vmatpush2.msra.mxu0 0.0
  %2132 = vmatprep.subr.mxu0 0.0
  %2133 = vmatpush2.msra.mxu0 0.0
  %2134 = vmatprep.subr.mxu0 0.0
  %2135 = vmatpush2.msra.mxu0 0.0
  %2136 = vmatprep.subr.mxu0 0.0
  %2137 = vmatpush2.msra.mxu0 0.0
  %2138 = vmatprep.subr.mxu0 0.0
  %2139 = vmatpush2.msra.mxu0 0.0
  %2140 = vmatprep.subr.mxu0 0.0
  %2141 = vmatpush2.msra.mxu0 0.0
  %2142 = vmatprep.subr.mxu0 0.0
  %2143 = vmatpush2.msra.mxu0 0.0
  %2144 = vmatprep.subr.mxu0 0.0
  %2145 = vmatpush2.msra.mxu0 0.0
  %2146 = vmatprep.subr.mxu0 0.0
  %2147 = vmatpush2.msra.mxu0 0.0
  %2148 = vmatprep.subr.mxu0 0.0
  %2149 = vmatpush2.msra.mxu0 0.0
  %2150 = vmatprep.subr.mxu0 0.0
  %2151 = vmatpush2.msra.mxu0 0.0
  %2152 = vmatprep.subr.mxu0 0.0
  %2153 = vmatpush2.msra.mxu0 0.0
  %2154 = vmatprep.mubr.f32.mxu0 0.0
  %2155 = vmatmul.mubr.f32.gmra.mxu0 %v2082
  %v2156 = vpop.f32.mrf.mxu0
  %v2157 = vadd.f32 %v2079, %v2156
  %v2158 = vpop.f32.mrf.mxu0
  %2159 = vmatprep.mubr.f32.mxu0 0.0
  %2160 = vmatmul.mubr.f32.gmra.mxu0 %v2085
  %v2161 = vpop.f32.mrf.mxu0
  %v2162 = vadd.f32 %v2079, %v2161
  %v2163 = vpop.f32.mrf.mxu0
  %2164 = vdwg.mxu0
  %v2165 = vxor.u32 %v2157, 2147483648
  %v2166 = vxor.u32 %v2162, 2147483648
  %v2167 = vmul.f32 %v2165, 1.442695
  %v2168 = vpow.pop %v2167
  %v2169 = vmul.f32 %v2166, 1.442695
  %v2170 = vpow.pop %v2169
  %v2171 = vadd.f32 %v2168, 1.0
  %v2172 = vadd.f32 %v2170, 1.0
  %v2173 = vrcp.pop %v2171
  %v2174 = vmul.f32 1.0, %v2173
  %v2175 = vrcp.pop %v2172
  %v2176 = vmul.f32 1.0, %v2175
  %v2177 = vxor.u32 %v1227, 2147483648
  %v2178 = vxor.u32 %v1232, 2147483648
  %v2179 = vmul.f32 %v2177, 1.442695
  %v2180 = vpow.pop %v2179
  %v2181 = vmul.f32 %v2178, 1.442695
  %v2182 = vpow.pop %v2181
  %v2183 = vadd.f32 %v2180, 1.0
  %v2184 = vadd.f32 %v2182, 1.0
  %v2185 = vrcp.pop %v2183
  %v2186 = vmul.f32 1.0, %v2185
  %v2187 = vrcp.pop %v2184
  %v2188 = vmul.f32 1.0, %v2187
  %v2189 = vmul.f32 %v2174, %v2186
  %v2190 = vmul.f32 %v2176, %v2188
  %vm2191 = vcmask 7168
  %2192 = vst.msk [vmem:[%s26] sm:$0xff] %vm2191, %v1227
  %2193 = vst.msk [vmem:[%s26 + $0x8] sm:$0xff] %vm2191, %v1232
  %2196 = vrot.lane.b32.xlu0 %v2157, 1
  %v2197 = vpop.permute.xlu0 %2196
  %2198 = vrot.lane.b32.xlu0 %v2162, 1
  %v2199 = vpop.permute.xlu0 %2198
  %vm2202 = vcmask 15368
  %2203 = vst.msk [vmem:[%s26] sm:$0xff] %vm2202, %v2197
  %2204 = vst.msk [vmem:[%s26 + $0x8] sm:$0xff] %vm2202, %v2199
  %2207 = vrot.lane.b32.xlu0 %v2189, 2
  %v2208 = vpop.permute.xlu0 %2207
  %2209 = vrot.lane.b32.xlu0 %v2190, 2
  %v2210 = vpop.permute.xlu0 %2209
  %vm2213 = vcmask 23568
  %2214 = vst.msk [vmem:[%s26] sm:$0xff] %vm2213, %v2208
  %2215 = vst.msk [vmem:[%s26 + $0x8] sm:$0xff] %vm2213, %v2210
  // Predicated region
  $region106: #{tpu_custom_call.1} parent=0 // pred_check
    _
  $region107: #{tpu_custom_call.1} parent=0 // pred_check_branch
    %2217 = sbr.rel (0) target = $region109
  $region108: #{tpu_custom_call.1} parent=0 // pred_region
    _
  $region109: #{tpu_custom_call.1} parent=0 // pred_fallthru
    _
  // Predicated region
  $region110: #{tpu_custom_call.1} parent=0 // pred_check
    _
  $region111: #{tpu_custom_call.1} parent=0 // pred_check_branch
    %2219 = sbr.rel (0) target = $region113
  $region112: #{tpu_custom_call.1} parent=0 // pred_region
    _
  $region113: #{tpu_custom_call.1} parent=0 // pred_fallthru
    _

</llo_original>
